<compile_context>
chip_gen: v7x
topology: tpu7x:2x2x1
jax: 0.10.0
libtpu: 0.0.40
codegen_flags: <defaults>
</compile_context>

<pallas_src>
import math
import functools

import jax
import jax.numpy as jnp
from jax.experimental import pallas as pl
from jax.experimental.pallas import tpu as pltpu


LANE = 128       # lane width; all feature dims padded to a multiple of this
ROW_PAD = 256    # node-count padding so there are always >= 2 row tiles (v7x megacore)
MAX_TILE = 512   # cap on row / contraction tile size


def _round_up(x, m):
    return ((x + m - 1) // m) * m


def _pick_tile(n_p, cap, min_tiles=1):
    """Largest multiple of 128 that divides n_p, <= cap, leaving >= min_tiles tiles."""
    t = cap if min_tiles <= 1 else min(cap, n_p // min_tiles)
    t = max(LANE, (t // LANE) * LANE)
    while n_p % t != 0:
        t -= LANE
    return t


def _vmem_limit_bytes():
    # Per-generation budget: v5e/v6e have 128 MiB VMEM, v7x only 64 MiB.
    try:
        cap = int(pltpu.get_tpu_info().vmem_capacity_bytes)
    except Exception:
        cap = 64 * 1024 * 1024
    return max(16 * 1024 * 1024, min(48 * 1024 * 1024, cap // 2))


# ---------------------------------------------------------------------------
# Kernel 1: per-node feature transform  XW = X @ W  (row-tiled, W resident).
# ---------------------------------------------------------------------------
def _xw_kernel(x_ref, w_ref, o_ref):
    o_ref[...] = jnp.dot(
        x_ref[...], w_ref[...], preferred_element_type=jnp.float32
    ).astype(o_ref.dtype)


def _feature_transform(x_bf16, w_bf16, *, tm):
    n_p, in_p = x_bf16.shape
    out_p = w_bf16.shape[1]
    n_tiles = n_p // tm
    cost = pl.CostEstimate(
        flops=2 * n_p * in_p * out_p,
        transcendentals=0,
        bytes_accessed=int(2 * n_p * in_p            # x stream (bf16)
                           + 2 * n_tiles * in_p * out_p  # W re-read per row tile
                           + 2 * n_p * out_p),           # output (bf16)
    )
    return pl.pallas_call(
        _xw_kernel,
        out_shape=jax.ShapeDtypeStruct((n_p, out_p), jnp.bfloat16),
        grid_spec=pltpu.PrefetchScalarGridSpec(
            num_scalar_prefetch=0,
            grid=(n_tiles,),
            in_specs=[
                pl.BlockSpec((tm, in_p), lambda i: (i, 0)),      # x row tile
                pl.BlockSpec((in_p, out_p), lambda i: (0, 0)),   # W (resident)
            ],
            out_specs=pl.BlockSpec((tm, out_p), lambda i: (i, 0)),
        ),
        compiler_params=pltpu.CompilerParams(
            dimension_semantics=("parallel",),
            vmem_limit_bytes=_vmem_limit_bytes(),
        ),
        cost_estimate=cost,
    )(x_bf16, w_bf16)


# ---------------------------------------------------------------------------
# Kernel 2: aggregation  A_hat @ XW + b  (+ relu | + log_softmax), row x k grid.
# ---------------------------------------------------------------------------
def _agg_kernel(adj_ref, xw_ref, b_ref, out_ref, acc_ref,
                *, apply_relu, apply_logsoftmax, valid_cols):
    k = pl.program_id(1)

    @pl.when(k == 0)
    def _():
        acc_ref[...] = jnp.zeros_like(acc_ref)

    acc_ref[...] += jnp.dot(adj_ref[...], xw_ref[...],
                            preferred_element_type=jnp.float32)

    @pl.when(k == pl.num_programs(1) - 1)
    def _():
        z = acc_ref[...] + b_ref[...]                 # [tm, out_p] f32
        if apply_relu:
            z = jnp.maximum(z, 0.0)
        if apply_logsoftmax:
            # Mask lane-padded class columns before the reduction; write 0.0
            # (not -inf) into padded columns so the raw output stays finite.
            col = jax.lax.broadcasted_iota(jnp.int32, z.shape, 1)
            valid = col < valid_cols
            zm = jnp.where(valid, z, -jnp.inf)
            m = jnp.max(zm, axis=1, keepdims=True)
            s = zm - m
            lse = jnp.log(jnp.sum(jnp.exp(s), axis=1, keepdims=True))
            z = jnp.where(valid, s - lse, 0.0)
        out_ref[...] = z.astype(out_ref.dtype)


def _aggregate(adj_bf16, xw_bf16, b_f32, *, out_dtype, apply_relu,
               apply_logsoftmax, valid_cols, tm, tk):
    n_p = adj_bf16.shape[0]
    out_p = xw_bf16.shape[1]
    n_row_tiles = n_p // tm
    out_bytes = jnp.dtype(out_dtype).itemsize
    kernel = functools.partial(
        _agg_kernel,
        apply_relu=apply_relu,
        apply_logsoftmax=apply_logsoftmax,
        valid_cols=valid_cols,
    )
    cost = pl.CostEstimate(
        flops=2 * n_p * n_p * out_p,
        transcendentals=(n_p * out_p if apply_logsoftmax else 0),
        bytes_accessed=int(2 * n_p * n_p                     # adjacency stream (bf16)
                           + 2 * n_row_tiles * n_p * out_p   # XW re-read per row tile
                           + out_bytes * n_p * out_p),       # output
    )
    return pl.pallas_call(
        kernel,
        out_shape=jax.ShapeDtypeStruct((n_p, out_p), out_dtype),
        grid_spec=pltpu.PrefetchScalarGridSpec(
            num_scalar_prefetch=0,
            grid=(n_row_tiles, n_p // tk),
            in_specs=[
                pl.BlockSpec((tm, tk), lambda i, k: (i, k)),      # adj tile
                pl.BlockSpec((tk, out_p), lambda i, k: (k, 0)),   # XW of k-tile
                pl.BlockSpec((1, out_p), lambda i, k: (0, 0)),    # bias (resident)
            ],
            out_specs=pl.BlockSpec((tm, out_p), lambda i, k: (i, 0)),
            scratch_shapes=[pltpu.VMEM((tm, out_p), jnp.float32)],
        ),
        compiler_params=pltpu.CompilerParams(
            dimension_semantics=("parallel", "arbitrary"),
            vmem_limit_bytes=_vmem_limit_bytes(),
        ),
        cost_estimate=cost,
    )(adj_bf16, xw_bf16, b_f32)


# ---------------------------------------------------------------------------
# Glue: gcn_norm (self-loops + symmetric normalization) -> dense adjacency,
# scattered directly at padded size in bf16 (one O(N^2) pass).
# Matches PyG's gcn_norm for an edge_index with no pre-existing self-loops.
# ---------------------------------------------------------------------------
def _gcn_norm_weights(edge_index, num_nodes):
    e = edge_index.shape[1]
    ew = jnp.ones((e,), jnp.float32)
    loop = jnp.arange(num_nodes, dtype=edge_index.dtype)
    ei = jnp.concatenate([edge_index, jnp.stack([loop, loop])], axis=1)
    ew = jnp.concatenate([ew, jnp.ones((num_nodes,), jnp.float32)])
    row, col = ei[0], ei[1]
    deg = jnp.zeros((num_nodes,), jnp.float32).at[col].add(ew)
    deg_inv_sqrt = jnp.where(deg > 0.0, jax.lax.rsqrt(deg), 0.0)
    w = deg_inv_sqrt[row] * ew * deg_inv_sqrt[col]
    return row, col, w


def gcn_norm_dense_padded_bf16(edge_index, num_nodes, n_pad):
    row, col, w = _gcn_norm_weights(edge_index, num_nodes)
    # Aggregation target is col (i); source is row (j):  out[i] += w * x[j]
    return jnp.zeros((n_pad, n_pad), jnp.bfloat16).at[col, row].add(
        w.astype(jnp.bfloat16))


def gcn_norm_dense_f32(edge_index, num_nodes):
    row, col, w = _gcn_norm_weights(edge_index, num_nodes)
    return jnp.zeros((num_nodes, num_nodes), jnp.float32).at[col, row].add(w)


# ---------------------------------------------------------------------------
# Deterministic parameter init (glorot for weights, zeros for bias).
# ---------------------------------------------------------------------------
def glorot(key, fan_in, fan_out):
    stdv = math.sqrt(6.0 / (fan_in + fan_out))
    return jax.random.uniform(
        key, (fan_in, fan_out), jnp.float32, minval=-stdv, maxval=stdv
    )


def _pad2(a, rows, cols):
    return jnp.pad(a, ((0, rows - a.shape[0]), (0, cols - a.shape[1])))


class GCNPallas:
    """aug=False GCN: GCNConv(F, H) -> relu -> dropout -> GCNConv(H, C) -> log_softmax."""

    def __init__(self, key, num_node_features, dim_size, num_classes):
        k1, k2 = jax.random.split(key)
        self.f, self.h, self.c = num_node_features, dim_size, num_classes
        self.fp = _round_up(num_node_features, LANE)
        self.hp = _round_up(dim_size, LANE)
        self.cp = _round_up(num_classes, LANE)

        # Unpadded f32 params (reference); lane-padded bf16 copies for the kernels.
        self.w1 = glorot(k1, num_node_features, dim_size)
        self.b1 = jnp.zeros((1, dim_size), jnp.float32)
        self.w2 = glorot(k2, dim_size, num_classes)
        self.b2 = jnp.zeros((1, num_classes), jnp.float32)

        self.w1p = _pad2(self.w1, self.fp, self.hp).astype(jnp.bfloat16)
        self.b1p = jnp.zeros((1, self.hp), jnp.float32)
        self.w2p = _pad2(self.w2, self.hp, self.cp).astype(jnp.bfloat16)
        self.b2p = jnp.zeros((1, self.cp), jnp.float32)

    @functools.partial(jax.jit, static_argnums=0)
    def __call__(self, x, edge_index):
        n = x.shape[0]
        n_p = _round_up(n, ROW_PAD)

        # Row tile: keep >= 2 tiles so v7x's two TensorCores both get work.
        tm = _pick_tile(n_p, MAX_TILE, min_tiles=2)
        tk = _pick_tile(n_p, MAX_TILE)

        # Normalized adjacency built once, directly at padded size, in bf16.
        adj_p = gcn_norm_dense_padded_bf16(edge_index, n, n_p)
        x_p = _pad2(x, n_p, self.fp).astype(jnp.bfloat16)

        # Layer 1: GCNConv(F -> H) + relu (dropout is identity in eval mode).
        xw1 = _feature_transform(x_p, self.w1p, tm=tm)
        h = _aggregate(
            adj_p, xw1, self.b1p,
            out_dtype=jnp.bfloat16, apply_relu=True, apply_logsoftmax=False,
            valid_cols=self.hp, tm=tm, tk=tk,
        )
        # Layer 2: GCNConv(H -> C) + log_softmax over real classes.
        hw2 = _feature_transform(h, self.w2p, tm=tm)
        out = _aggregate(
            adj_p, hw2, self.b2p,
            out_dtype=jnp.float32, apply_relu=False, apply_logsoftmax=True,
            valid_cols=self.c, tm=tm, tk=tk,
        )
        return out[:n, :self.c]

    # Pure-JAX f32 reference of the same forward pass (for tolerance check).
    def reference(self, x, edge_index):
        adj = gcn_norm_dense_f32(edge_index, x.shape[0])
        h = jnp.maximum(adj @ (x @ self.w1) + self.b1, 0.0)
        z = adj @ (h @ self.w2) + self.b2
        return jax.nn.log_softmax(z, axis=1)


if __name__ == "__main__":
    N_NODES = 32          # number of graph nodes
    N_FEATURES = 16       # dataset['num_node_features']
    DIM_SIZE = 32         # args.dim_size (hidden width)
    N_CLASSES = 8         # dataset['num_classes']

    key = jax.random.PRNGKey(0)
    k_x, k_params = jax.random.split(key)

    # Node features [N, F]
    x = jax.random.normal(k_x, (N_NODES, N_FEATURES), jnp.float32)

    # Deterministic ring graph (bidirectional), no self-loops in the input.
    src = jnp.arange(N_NODES, dtype=jnp.int32)
    dst = (src + 1) % N_NODES
    edge_index = jnp.concatenate(
        [jnp.stack([src, dst]), jnp.stack([dst, src])], axis=1
    )  # [2, 2N]

    model = GCNPallas(k_params, N_FEATURES, DIM_SIZE, N_CLASSES)
    out = model(x, edge_index)                   # [N, C] log-probabilities
    out = jax.block_until_ready(out)

    assert out.shape == (N_NODES, N_CLASSES)
    # Rows of log_softmax must exponentiate-sum to ~1.
    assert jnp.allclose(jnp.sum(jnp.exp(out), axis=1), 1.0, atol=1e-4)
    # Loose check against the f32 reference (kernel runs bf16 MXU / f32 accum).
    ref = model.reference(x, edge_index)
    assert jnp.max(jnp.abs(out - ref)) < 0.1, float(jnp.max(jnp.abs(out - ref)))
    print("KERNEL_OK")
</pallas_src>

<mosaic_0001>
module attributes {stable_mosaic.version = 11 : i64} {
  func.func private @main(%arg0: i32) attributes {dimension_semantics = [#tpu.dimension_semantics<core_parallel>], iteration_bounds = array<i64: 2>, tpu.core_type = #tpu.core_type<sc_scalar_subcore>, window_params = []} {
    return
  }
}

module attributes {stable_mosaic.version = 11 : i64} {
  func.func private @main(%arg0: i32) attributes {dimension_semantics = [#tpu.dimension_semantics<core_parallel>], iteration_bounds = array<i64: 2>, tpu.core_type = #tpu.core_type<sc_scalar_subcore>, window_params = []} {
    return
  }
}

module attributes {stable_mosaic.version = 11 : i64} {
  func.func @_xw_kernel(%arg0: i32, %arg1: memref<128x128xbf16, #tpu.memory_space<vmem>>, %arg2: memref<128x128xbf16, #tpu.memory_space<vmem>>, %arg3: memref<128x128xbf16, #tpu.memory_space<vmem>>) attributes {dimension_semantics = [#tpu.dimension_semantics<parallel>], iteration_bounds = array<i64: 2>, scalar_prefetch = 0 : i64, scratch_operands = 0 : i64, tpu.core_type = #tpu.core_type<tc>, window_params = [{transform_indices = @transform_0, window_bounds = array<i64: 128, 128>}, {pipeline_mode = #tpu.pipeline_mode<synchronous>, transform_indices = @transform_1, window_bounds = array<i64: 128, 128>}, {transform_indices = @transform_2, window_bounds = array<i64: 128, 128>}]} {
    %c0 = arith.constant 0 : index
    %c0_0 = arith.constant 0 : index
    %0 = vector.load %arg1[%c0, %c0_0] : memref<128x128xbf16, #tpu.memory_space<vmem>>, vector<128x128xbf16>
    %c0_1 = arith.constant 0 : index
    %c0_2 = arith.constant 0 : index
    %1 = vector.load %arg2[%c0_1, %c0_2] : memref<128x128xbf16, #tpu.memory_space<vmem>>, vector<128x128xbf16>
    %cst = arith.constant dense<0.000000e+00> : vector<128x128xf32>
    %2 = tpu.matmul %0, %1, %cst {dimension_numbers = #tpu.dot_dimension_numbers<[1], [0], [0], [1], [0, 0, 1, 1], [], []>} : vector<128x128xbf16>, vector<128x128xbf16>, vector<128x128xf32> -> vector<128x128xf32>
    %3 = arith.truncf %2 : vector<128x128xf32> to vector<128x128xbf16>
    %c0_3 = arith.constant 0 : index
    %c0_4 = arith.constant 0 : index
    %4 = vector.load %arg3[%c0_3, %c0_4] : memref<128x128xbf16, #tpu.memory_space<vmem>>, vector<128x128xbf16>
    tpu.vector_store %arg3[%c0_3, %c0_4], %3 {strides = array<i32>} : memref<128x128xbf16, #tpu.memory_space<vmem>>, vector<128x128xbf16>,
    return
  }
  func.func @transform_0(%arg0: i32) -> (i32, i32) {
    %c0_i32 = arith.constant 0 : i32
    %c0_i32_0 = arith.constant 0 : i32
    return %arg0, %c0_i32 : i32, i32
  }
  func.func @transform_1(%arg0: i32) -> (i32, i32) {
    %c0_i32 = arith.constant 0 : i32
    %c0_i32_0 = arith.constant 0 : i32
    %c0_i32_1 = arith.constant 0 : i32
    return %c0_i32, %c0_i32_0 : i32, i32
  }
  func.func @transform_2(%arg0: i32) -> (i32, i32) {
    %c0_i32 = arith.constant 0 : i32
    %c0_i32_0 = arith.constant 0 : i32
    return %arg0, %c0_i32 : i32, i32
  }
}

module attributes {stable_mosaic.version = 11 : i64} {
  func.func @_agg_kernel(%arg0: i32, %arg1: i32, %arg2: memref<128x256xbf16, #tpu.memory_space<vmem>>, %arg3: memref<256x128xbf16, #tpu.memory_space<vmem>>, %arg4: memref<1x128xf32, #tpu.memory_space<vmem>>, %arg5: memref<128x128xbf16, #tpu.memory_space<vmem>>, %arg6: memref<128x128xf32, #tpu.memory_space<vmem>>) attributes {dimension_semantics = [#tpu.dimension_semantics<parallel>, #tpu.dimension_semantics<arbitrary>], iteration_bounds = array<i64: 2, 1>, scalar_prefetch = 0 : i64, scratch_operands = 1 : i64, tpu.core_type = #tpu.core_type<tc>, window_params = [{transform_indices = @transform_0, window_bounds = array<i64: 128, 256>}, {transform_indices = @transform_1, window_bounds = array<i64: 256, 128>}, {pipeline_mode = #tpu.pipeline_mode<synchronous>, transform_indices = @transform_2, window_bounds = array<i64: 1, 128>}, {transform_indices = @transform_3, window_bounds = array<i64: 128, 128>}]} {
    %c0_i32 = arith.constant 0 : i32
    %0 = arith.cmpi eq, %arg1, %c0_i32 : i32
    %1 = arith.extui %0 : i1 to i32
    %c0_i32_0 = arith.constant 0 : i32
    %2 = arith.cmpi ne, %1, %c0_i32_0 : i32
    scf.if %2 {
      %cst_10 = arith.constant 0.000000e+00 : f32
      %12 = vector.broadcast %cst_10 : f32 to vector<128x128xf32>
      %c0_11 = arith.constant 0 : index
      %c0_12 = arith.constant 0 : index
      %13 = vector.load %arg6[%c0_11, %c0_12] : memref<128x128xf32, #tpu.memory_space<vmem>>, vector<128x128xf32>
      tpu.vector_store %arg6[%c0_11, %c0_12], %12 {strides = array<i32>} : memref<128x128xf32, #tpu.memory_space<vmem>>, vector<128x128xf32>,
    } else {
    }
    %c0 = arith.constant 0 : index
    %c0_1 = arith.constant 0 : index
    %3 = vector.load %arg6[%c0, %c0_1] : memref<128x128xf32, #tpu.memory_space<vmem>>, vector<128x128xf32>
    %c0_2 = arith.constant 0 : index
    %c0_3 = arith.constant 0 : index
    %4 = vector.load %arg2[%c0_2, %c0_3] : memref<128x256xbf16, #tpu.memory_space<vmem>>, vector<128x256xbf16>
    %c0_4 = arith.constant 0 : index
    %c0_5 = arith.constant 0 : index
    %5 = vector.load %arg3[%c0_4, %c0_5] : memref<256x128xbf16, #tpu.memory_space<vmem>>, vector<256x128xbf16>
    %cst = arith.constant dense<0.000000e+00> : vector<128x128xf32>
    %6 = tpu.matmul %4, %5, %cst {dimension_numbers = #tpu.dot_dimension_numbers<[1], [0], [0], [1], [0, 0, 1, 1], [], []>} : vector<128x256xbf16>, vector<256x128xbf16>, vector<128x128xf32> -> vector<128x128xf32>
    %7 = arith.addf %3, %6 : vector<128x128xf32>
    %c0_6 = arith.constant 0 : index
    %c0_7 = arith.constant 0 : index
    %8 = vector.load %arg6[%c0_6, %c0_7] : memref<128x128xf32, #tpu.memory_space<vmem>>, vector<128x128xf32>
    tpu.vector_store %arg6[%c0_6, %c0_7], %7 {strides = array<i32>} : memref<128x128xf32, #tpu.memory_space<vmem>>, vector<128x128xf32>,
    %c0_i32_8 = arith.constant 0 : i32
    %9 = arith.cmpi eq, %arg1, %c0_i32_8 : i32
    %10 = arith.extui %9 : i1 to i32
    %c0_i32_9 = arith.constant 0 : i32
    %11 = arith.cmpi ne, %10, %c0_i32_9 : i32
    scf.if %11 {
      %c0_10 = arith.constant 0 : index
      %c0_11 = arith.constant 0 : index
      %12 = vector.load %arg6[%c0_10, %c0_11] : memref<128x128xf32, #tpu.memory_space<vmem>>, vector<128x128xf32>
      %c0_12 = arith.constant 0 : index
      %c0_13 = arith.constant 0 : index
      %13 = vector.load %arg4[%c0_12, %c0_13] : memref<1x128xf32, #tpu.memory_space<vmem>>, vector<1x128xf32>
      %14 = vector.broadcast %13 : vector<1x128xf32> to vector<128x128xf32>
      %15 = arith.addf %12, %14 : vector<128x128xf32>
      %cst_14 = arith.constant 0.000000e+00 : f32
      %16 = vector.broadcast %cst_14 : f32 to vector<128x128xf32>
      %17 = arith.maximumf %15, %16 : vector<128x128xf32>
      %18 = arith.truncf %17 : vector<128x128xf32> to vector<128x128xbf16>
      %c0_15 = arith.constant 0 : index
      %c0_16 = arith.constant 0 : index
      %19 = vector.load %arg5[%c0_15, %c0_16] : memref<128x128xbf16, #tpu.memory_space<vmem>>, vector<128x128xbf16>
      tpu.vector_store %arg5[%c0_15, %c0_16], %18 {strides = array<i32>} : memref<128x128xbf16, #tpu.memory_space<vmem>>, vector<128x128xbf16>,
    } else {
    }
    return
  }
  func.func @transform_0(%arg0: i32, %arg1: i32) -> (i32, i32) {
    %c0_i32 = arith.constant 0 : i32
    return %arg0, %arg1 : i32, i32
  }
  func.func @transform_1(%arg0: i32, %arg1: i32) -> (i32, i32) {
    %c0_i32 = arith.constant 0 : i32
    %c0_i32_0 = arith.constant 0 : i32
    return %arg1, %c0_i32 : i32, i32
  }
  func.func @transform_2(%arg0: i32, %arg1: i32) -> (i32, i32) {
    %c0_i32 = arith.constant 0 : i32
    %c0_i32_0 = arith.constant 0 : i32
    %c0_i32_1 = arith.constant 0 : i32
    return %c0_i32, %c0_i32_0 : i32, i32
  }
  func.func @transform_3(%arg0: i32, %arg1: i32) -> (i32, i32) {
    %c0_i32 = arith.constant 0 : i32
    %c0_i32_0 = arith.constant 0 : i32
    return %arg0, %c0_i32 : i32, i32
  }
}

module attributes {stable_mosaic.version = 11 : i64} {
  func.func @_agg_kernel(%arg0: i32, %arg1: i32, %arg2: memref<128x256xbf16, #tpu.memory_space<vmem>>, %arg3: memref<256x128xbf16, #tpu.memory_space<vmem>>, %arg4: memref<1x128xf32, #tpu.memory_space<vmem>>, %arg5: memref<128x128xf32, #tpu.memory_space<vmem>>, %arg6: memref<128x128xf32, #tpu.memory_space<vmem>>) attributes {dimension_semantics = [#tpu.dimension_semantics<parallel>, #tpu.dimension_semantics<arbitrary>], iteration_bounds = array<i64: 2, 1>, scalar_prefetch = 0 : i64, scratch_operands = 1 : i64, tpu.core_type = #tpu.core_type<tc>, window_params = [{transform_indices = @transform_0, window_bounds = array<i64: 128, 256>}, {transform_indices = @transform_1, window_bounds = array<i64: 256, 128>}, {pipeline_mode = #tpu.pipeline_mode<synchronous>, transform_indices = @transform_2, window_bounds = array<i64: 1, 128>}, {transform_indices = @transform_3, window_bounds = array<i64: 128, 128>}]} {
    %c0_i32 = arith.constant 0 : i32
    %0 = arith.cmpi eq, %arg1, %c0_i32 : i32
    %1 = arith.extui %0 : i1 to i32
    %c0_i32_0 = arith.constant 0 : i32
    %2 = arith.cmpi ne, %1, %c0_i32_0 : i32
    scf.if %2 {
      %cst_10 = arith.constant 0.000000e+00 : f32
      %12 = vector.broadcast %cst_10 : f32 to vector<128x128xf32>
      %c0_11 = arith.constant 0 : index
      %c0_12 = arith.constant 0 : index
      %13 = vector.load %arg6[%c0_11, %c0_12] : memref<128x128xf32, #tpu.memory_space<vmem>>, vector<128x128xf32>
      tpu.vector_store %arg6[%c0_11, %c0_12], %12 {strides = array<i32>} : memref<128x128xf32, #tpu.memory_space<vmem>>, vector<128x128xf32>,
    } else {
    }
    %c0 = arith.constant 0 : index
    %c0_1 = arith.constant 0 : index
    %3 = vector.load %arg6[%c0, %c0_1] : memref<128x128xf32, #tpu.memory_space<vmem>>, vector<128x128xf32>
    %c0_2 = arith.constant 0 : index
    %c0_3 = arith.constant 0 : index
    %4 = vector.load %arg2[%c0_2, %c0_3] : memref<128x256xbf16, #tpu.memory_space<vmem>>, vector<128x256xbf16>
    %c0_4 = arith.constant 0 : index
    %c0_5 = arith.constant 0 : index
    %5 = vector.load %arg3[%c0_4, %c0_5] : memref<256x128xbf16, #tpu.memory_space<vmem>>, vector<256x128xbf16>
    %cst = arith.constant dense<0.000000e+00> : vector<128x128xf32>
    %6 = tpu.matmul %4, %5, %cst {dimension_numbers = #tpu.dot_dimension_numbers<[1], [0], [0], [1], [0, 0, 1, 1], [], []>} : vector<128x256xbf16>, vector<256x128xbf16>, vector<128x128xf32> -> vector<128x128xf32>
    %7 = arith.addf %3, %6 : vector<128x128xf32>
    %c0_6 = arith.constant 0 : index
    %c0_7 = arith.constant 0 : index
    %8 = vector.load %arg6[%c0_6, %c0_7] : memref<128x128xf32, #tpu.memory_space<vmem>>, vector<128x128xf32>
    tpu.vector_store %arg6[%c0_6, %c0_7], %7 {strides = array<i32>} : memref<128x128xf32, #tpu.memory_space<vmem>>, vector<128x128xf32>,
    %c0_i32_8 = arith.constant 0 : i32
    %9 = arith.cmpi eq, %arg1, %c0_i32_8 : i32
    %10 = arith.extui %9 : i1 to i32
    %c0_i32_9 = arith.constant 0 : i32
    %11 = arith.cmpi ne, %10, %c0_i32_9 : i32
    scf.if %11 {
      %c0_10 = arith.constant 0 : index
      %c0_11 = arith.constant 0 : index
      %12 = vector.load %arg6[%c0_10, %c0_11] : memref<128x128xf32, #tpu.memory_space<vmem>>, vector<128x128xf32>
      %c0_12 = arith.constant 0 : index
      %c0_13 = arith.constant 0 : index
      %13 = vector.load %arg4[%c0_12, %c0_13] : memref<1x128xf32, #tpu.memory_space<vmem>>, vector<1x128xf32>
      %14 = vector.broadcast %13 : vector<1x128xf32> to vector<128x128xf32>
      %15 = arith.addf %12, %14 : vector<128x128xf32>
      %16 = tpu.iota {dimensions = array<i32: 1>} : vector<128x128xi32>
      %c8_i32 = arith.constant 8 : i32
      %17 = vector.broadcast %c8_i32 : i32 to vector<128x128xi32>
      %18 = arith.cmpi slt, %16, %17 : vector<128x128xi32>
      %cst_14 = arith.constant 0xFF800000 : f32
      %19 = vector.broadcast %cst_14 : f32 to vector<128x128xf32>
      %20 = arith.select %18, %15, %19 : vector<128x128xi1>, vector<128x128xf32>
      %cst_15 = arith.constant dense<0xFF800000> : vector<128xf32>
      %21 = vector.multi_reduction <maximumf>, %20, %cst_15 [1] : vector<128x128xf32> to vector<128xf32>
      %22 = vector.shape_cast %21 : vector<128xf32> to vector<128x1xf32>
      %23 = vector.broadcast %22 : vector<128x1xf32> to vector<128x128xf32>
      %24 = arith.subf %20, %23 : vector<128x128xf32>
      %25 = math.exp %24 : vector<128x128xf32>
      %cst_16 = arith.constant dense<0.000000e+00> : vector<128xf32>
      %26 = vector.multi_reduction <add>, %25, %cst_16 [1] : vector<128x128xf32> to vector<128xf32>
      %27 = vector.shape_cast %26 : vector<128xf32> to vector<128x1xf32>
      %28 = math.log %27 : vector<128x1xf32>
      %29 = vector.broadcast %28 : vector<128x1xf32> to vector<128x128xf32>
      %30 = arith.subf %24, %29 : vector<128x128xf32>
      %cst_17 = arith.constant 0.000000e+00 : f32
      %31 = vector.broadcast %cst_17 : f32 to vector<128x128xf32>
      %32 = arith.select %18, %30, %31 : vector<128x128xi1>, vector<128x128xf32>
      %c0_18 = arith.constant 0 : index
      %c0_19 = arith.constant 0 : index
      %33 = vector.load %arg5[%c0_18, %c0_19] : memref<128x128xf32, #tpu.memory_space<vmem>>, vector<128x128xf32>
      tpu.vector_store %arg5[%c0_18, %c0_19], %32 {strides = array<i32>} : memref<128x128xf32, #tpu.memory_space<vmem>>, vector<128x128xf32>,
    } else {
    }
    return
  }
  func.func @transform_0(%arg0: i32, %arg1: i32) -> (i32, i32) {
    %c0_i32 = arith.constant 0 : i32
    return %arg0, %arg1 : i32, i32
  }
  func.func @transform_1(%arg0: i32, %arg1: i32) -> (i32, i32) {
    %c0_i32 = arith.constant 0 : i32
    %c0_i32_0 = arith.constant 0 : i32
    return %arg1, %c0_i32 : i32, i32
  }
  func.func @transform_2(%arg0: i32, %arg1: i32) -> (i32, i32) {
    %c0_i32 = arith.constant 0 : i32
    %c0_i32_0 = arith.constant 0 : i32
    %c0_i32_1 = arith.constant 0 : i32
    return %c0_i32, %c0_i32_0 : i32, i32
  }
  func.func @transform_3(%arg0: i32, %arg1: i32) -> (i32, i32) {
    %c0_i32 = arith.constant 0 : i32
    %c0_i32_0 = arith.constant 0 : i32
    return %arg0, %c0_i32 : i32, i32
  }
}

</mosaic_0001>

<llo_original>
// kernel: a_call__.4
$region0: #{a_call__.4}
  #allocation0 [shape = 'u32[]', space=smem, size = 0x4, offset = 0x4, fixed_abs, tag = 'smem constant byte address 0x4 - core index']
  #allocation1 [shape = 'u32[144,128]{1,0:T(1,128)}', space=vmem, size = 0x12000, scoped, tag = 'internal scratch']
  %s0 = inlined_call_operand.vmem [shape: bf16[256,128], index: 0, kind: input, shape index: {}]
  %s1 = inlined_call_operand.vmem [shape: bf16[128,128], index: 1, kind: input, shape index: {}]
  %s2 = inlined_call_operand.vmem [shape: bf16[256,128], index: 2, kind: output, shape index: {}]
  %s3 = sld [smem:[#allocation0]]
  $region41: #{a_call__.4} parent=0
    _
  %s5 = ssub.s32 1, %s3
  %s6 = scalar_select 0, %s5, %s3
  loop: start=0, step=1, limit=4
  $region2: #{a_call__.4} parent=0 // loop_pre_header
    _
  $region3: #{a_call__.4} parent=0 // loop_header
    %s8 = sphi 0, %s12
    %p9 = scmp.ge.s32.totalorder %s8, 4
    %s18 = sphi 0, %s20
    %s21 = sphi 0, %s18
    %s22 = sphi 0, %s21
    %s38 = sphi 0, %s22
    %s42 = sphi 0, %s42
    %s44 = sphi 0, %s42
    %s45 = sphi 0, %s44
    %s59 = sphi 0, %s45
    %s65 = sphi 0, %s67
    %s68 = sphi 0, %s65
    %s69 = sphi 0, %s68
    %s85 = sphi 0, %s69
  $region4: #{a_call__.4} parent=0 // loop_header_branch
    %11 = sbr.rel (%p9) target = $region8
  $region5: #{a_call__.4} parent=0 // loop_body
    %s13 = ssub.s32 %s8, 1
    %s14 = ssub.s32 %s8, 2
    %s15 = sadd.s32 %s8, 1
    %s16 = ssub.s32 %s8, %s15
    %p17 = scmp.eq.s32.totalorder %s16, 0
    %s19 = sadd.s32 %s18, 1
    %s20 = scalar_select %p17, %s18, %s19
    %p23 = pneg %p17
    %p24 = scmp.eq.s32.totalorder %s8, 1
    %p25 = por %p23, %p24
    %p26 = scmp.ne.s32.totalorder %s18, %s21
    %p27 = scmp.eq.s32.totalorder %s8, 0
    %p28 = por %p26, %p27
    %p29 = scmp.ne.s32.totalorder %s18, %s21
    %p30 = scmp.eq.s32.totalorder %s13, 1
    %p31 = por %p29, %p30
    %p32 = scmp.ne.s32.totalorder %s21, %s22
    %p33 = scmp.eq.s32.totalorder %s13, 0
    %p34 = por %p32, %p33
    %p35 = scmp.ne.s32.totalorder %s21, %s22
    %p36 = scmp.eq.s32.totalorder %s14, 1
    %p37 = por %p35, %p36
    %p39 = scmp.ne.s32.totalorder %s22, %s38
    %p40 = scmp.eq.s32.totalorder %s14, 0
    %p41 = por %p39, %p40
    %s43 = sadd.s32 %s42, 1
    %p46 = scmp.eq.s32.totalorder %s8, 1
    %p47 = scmp.ne.s32.totalorder %s42, %s44
    %p48 = scmp.eq.s32.totalorder %s8, 0
    %p49 = por %p47, %p48
    %p50 = scmp.ne.s32.totalorder %s42, %s44
    %p51 = scmp.eq.s32.totalorder %s13, 1
    %p52 = por %p50, %p51
    %p53 = scmp.ne.s32.totalorder %s44, %s45
    %p54 = scmp.eq.s32.totalorder %s13, 0
    %p55 = por %p53, %p54
    %p56 = scmp.ne.s32.totalorder %s44, %s45
    %p57 = scmp.eq.s32.totalorder %s14, 1
    %p58 = por %p56, %p57
    %p60 = scmp.ne.s32.totalorder %s45, %s59
    %p61 = scmp.eq.s32.totalorder %s14, 0
    %p62 = por %p60, %p61
    %s63 = ssub.s32 %s8, %s15
    %p64 = scmp.eq.s32.totalorder %s63, 0
    %s66 = sadd.s32 %s65, 1
    %s67 = scalar_select %p64, %s65, %s66
    %p70 = pneg %p64
    %p71 = scmp.eq.s32.totalorder %s8, 1
    %p72 = por %p70, %p71
    %p73 = scmp.ne.s32.totalorder %s65, %s68
    %p74 = scmp.eq.s32.totalorder %s8, 0
    %p75 = por %p73, %p74
    %p76 = scmp.ne.s32.totalorder %s65, %s68
    %p77 = scmp.eq.s32.totalorder %s13, 1
    %p78 = por %p76, %p77
    %p79 = scmp.ne.s32.totalorder %s68, %s69
    %p80 = scmp.eq.s32.totalorder %s13, 0
    %p81 = por %p79, %p80
    %p82 = scmp.ne.s32.totalorder %s68, %s69
    %p83 = scmp.eq.s32.totalorder %s14, 1
    %p84 = por %p82, %p83
    %p86 = scmp.ne.s32.totalorder %s69, %s85
    %p87 = scmp.eq.s32.totalorder %s14, 0
    %p88 = por %p86, %p87
    %p89 = scmp.le.s32.totalorder 1, %s8
    %p90 = scmp.lt.s32.totalorder %s8, 3
    %p91 = pnand %p89, %p90
    %p92 = pneg %p91
    // Predicated region
    $region9: #{a_call__.4} parent=5 // pred_check
      _
    $region10: #{a_call__.4} parent=5 // pred_check_branch
      %94 = sbr.rel (%p91) target = $region12
    $region11: #{a_call__.4} parent=5 // pred_region
      %s95 = ssub.s32 %s8, 1
      // Predicated region
      $region13: #{a_call__.4} parent=11 // pred_check
        %p96 = pneg %p55
      $region14: #{a_call__.4} parent=11 // pred_check_branch
        %98 = sbr.rel (%p96) target = $region16
      $region15: #{a_call__.4} parent=11 // pred_region
        _
      $region16: #{a_call__.4} parent=11 // pred_fallthru
        _
    $region12: #{a_call__.4} parent=5 // pred_fallthru
      _
    %p99 = scmp.lt.s32.totalorder %s8, 2
    // Predicated region
    $region17: #{a_call__.4} parent=5 // pred_check
      %p100 = pneg %p99
    $region18: #{a_call__.4} parent=5 // pred_check_branch
      %102 = sbr.rel (%p100) target = $region20
    $region19: #{a_call__.4} parent=5 // pred_region
      // Predicated region
      $region21: #{a_call__.4} parent=19 // pred_check
        %p103 = pneg %p28
      $region22: #{a_call__.4} parent=19 // pred_check_branch
        %105 = sbr.rel (%p103) target = $region24
      $region23: #{a_call__.4} parent=19 // pred_region
        %s106 = smul.u32 16, %s8
        %p107 = scmp.lt.s32.totalorder %s106, 31
        %s108 = scalar_select %p107, %s106, 31
        %s109 = smul.addr %s108, 4
        %s110 = scalar_lea.vmem %s0, %s109
        %s111 = smul.u32 16, %s8
      $region24: #{a_call__.4} parent=19 // pred_fallthru
        _
    $region20: #{a_call__.4} parent=5 // pred_fallthru
      _
    %p112 = scmp.le.s32.totalorder 1, %s8
    %p113 = scmp.lt.s32.totalorder %s8, 3
    %p114 = pnand %p112, %p113
    %p115 = pneg %p114
    // Predicated region
    $region25: #{a_call__.4} parent=5 // pred_check
      _
    $region26: #{a_call__.4} parent=5 // pred_check_branch
      %117 = sbr.rel (%p114) target = $region28
    $region27: #{a_call__.4} parent=5 // pred_region
      %s118 = ssub.s32 %s8, 1
      %s119 = smul.u32 16, %s13
      %p120 = scmp.lt.s32.totalorder %s119, 31
      %s121 = scalar_select %p120, %s119, 31
      %s122 = smul.addr %s121, 4
      %s123 = scalar_lea.vmem %s0, %s122
      %p124 = pneg %p34
      %p125 = pneg %p31
      %p126 = pneg %p55
      %p127 = pneg %p52
      %p128 = pneg %p81
      %p129 = pneg %p78
      %s130 = smul.u32 16, %s13
      %p131 = scmp.lt.s32.totalorder %s130, 31
      %s132 = scalar_select %p131, %s130, 31
      %s133 = smul.addr %s132, 4
      %s134 = scalar_lea.vmem %s2, %s133
      %s135 = smul.u32 16, %s13
      %p136 = scmp.lt.s32.totalorder %s135, 31
      %s137 = scalar_select %p136, %s135, 31
      %s138 = smul.addr %s137, 4
      %s139 = scalar_lea.vmem %s0, %s138
      %s140 = smul.u32 16, %s13
      %s141 = smul.u32 16, %s13
      %p142 = scmp.lt.s32.totalorder %s141, 31
      %s143 = scalar_select %p142, %s141, 31
      %s144 = smul.addr %s143, 4
      %s145 = scalar_lea.vmem %s2, %s144
      %s146 = smul.u32 16, %s13
      %v148 = vld [vmem:[%s139] sm:$0xf]
      %v149 = vld [vmem:[%s139 + $0x4] sm:$0xf]
      %v150 = vld [vmem:[%s139 + $0x8] sm:$0xf]
      %v151 = vld [vmem:[%s139 + $0xc] sm:$0xf]
      %v152 = vld [vmem:[%s139 + $0x10] sm:$0xf]
      %v153 = vld [vmem:[%s139 + $0x14] sm:$0xf]
      %v154 = vld [vmem:[%s139 + $0x18] sm:$0xf]
      %v155 = vld [vmem:[%s139 + $0x1c] sm:$0xf]
      %v156 = vld [vmem:[%s139 + $0x20] sm:$0xf]
      %v157 = vld [vmem:[%s139 + $0x24] sm:$0xf]
      %v158 = vld [vmem:[%s139 + $0x28] sm:$0xf]
      %v159 = vld [vmem:[%s139 + $0x2c] sm:$0xf]
      %v160 = vld [vmem:[%s139 + $0x30] sm:$0xf]
      %v161 = vld [vmem:[%s139 + $0x34] sm:$0xf]
      %v162 = vld [vmem:[%s139 + $0x38] sm:$0xf]
      %v163 = vld [vmem:[%s139 + $0x3c] sm:$0xf]
      %v164 = vld [vmem:[%s1] sm:$0xf]
      %v165 = vld [vmem:[%s1 + $0x4] sm:$0xf]
      %v166 = vld [vmem:[%s1 + $0x8] sm:$0xf]
      %v167 = vld [vmem:[%s1 + $0xc] sm:$0xf]
      %v168 = vld [vmem:[%s1 + $0x10] sm:$0xf]
      %v169 = vld [vmem:[%s1 + $0x14] sm:$0xf]
      %v170 = vld [vmem:[%s1 + $0x18] sm:$0xf]
      %v171 = vld [vmem:[%s1 + $0x1c] sm:$0xf]
      %v172 = vld [vmem:[%s1 + $0x20] sm:$0xf]
      %v173 = vld [vmem:[%s1 + $0x24] sm:$0xf]
      %v174 = vld [vmem:[%s1 + $0x28] sm:$0xf]
      %v175 = vld [vmem:[%s1 + $0x2c] sm:$0xf]
      %v176 = vld [vmem:[%s1 + $0x30] sm:$0xf]
      %v177 = vld [vmem:[%s1 + $0x34] sm:$0xf]
      %v178 = vld [vmem:[%s1 + $0x38] sm:$0xf]
      %v179 = vld [vmem:[%s1 + $0x3c] sm:$0xf]
      %v196 = vunpack.c.l.b16 %v148
      %v197 = vunpack.c.l.b16 %v149
      %v198 = vunpack.c.l.b16 %v150
      %v199 = vunpack.c.l.b16 %v151
      %v200 = vunpack.c.l.b16 %v152
      %v201 = vunpack.c.l.b16 %v153
      %v202 = vunpack.c.l.b16 %v154
      %v203 = vunpack.c.l.b16 %v155
      %v204 = vunpack.c.l.b16 %v156
      %v205 = vunpack.c.l.b16 %v157
      %v206 = vunpack.c.l.b16 %v158
      %v207 = vunpack.c.l.b16 %v159
      %v208 = vunpack.c.l.b16 %v160
      %v209 = vunpack.c.l.b16 %v161
      %v210 = vunpack.c.l.b16 %v162
      %v211 = vunpack.c.l.b16 %v163
      %v212 = vpack.c.b16 %v197, %v196
      %v213 = vpack.c.b16 %v199, %v198
      %v214 = vpack.c.b16 %v201, %v200
      %v215 = vpack.c.b16 %v203, %v202
      %v216 = vpack.c.b16 %v205, %v204
      %v217 = vpack.c.b16 %v207, %v206
      %v218 = vpack.c.b16 %v209, %v208
      %v219 = vpack.c.b16 %v211, %v210
      %v244 = vunpack.c.l.b16 %v164
      %v245 = vunpack.c.l.b16 %v165
      %v246 = vunpack.c.l.b16 %v166
      %v247 = vunpack.c.l.b16 %v167
      %v248 = vunpack.c.l.b16 %v168
      %v249 = vunpack.c.l.b16 %v169
      %v250 = vunpack.c.l.b16 %v170
      %v251 = vunpack.c.l.b16 %v171
      %v252 = vunpack.c.l.b16 %v172
      %v253 = vunpack.c.l.b16 %v173
      %v254 = vunpack.c.l.b16 %v174
      %v255 = vunpack.c.l.b16 %v175
      %v256 = vunpack.c.l.b16 %v176
      %v257 = vunpack.c.l.b16 %v177
      %v258 = vunpack.c.l.b16 %v178
      %v259 = vunpack.c.l.b16 %v179
      %v260 = vpack.c.b16 %v245, %v244
      %v261 = vpack.c.b16 %v247, %v246
      %v262 = vpack.c.b16 %v249, %v248
      %v263 = vpack.c.b16 %v251, %v250
      %v264 = vpack.c.b16 %v253, %v252
      %v265 = vpack.c.b16 %v255, %v254
      %v266 = vpack.c.b16 %v257, %v256
      %v267 = vpack.c.b16 %v259, %v258
      %276 = vmatprep.subr.bf16.mxu0 0
      %277 = vmatpush1.bf16.msra.mxu0 %v260
      %278 = vmatprep.subr.bf16.mxu0 0
      %279 = vmatpush1.bf16.msra.mxu0 %v261
      %280 = vmatprep.subr.bf16.mxu0 0
      %281 = vmatpush1.bf16.msra.mxu0 %v262
      %282 = vmatprep.subr.bf16.mxu0 0
      %283 = vmatpush1.bf16.msra.mxu0 %v263
      %284 = vmatprep.subr.bf16.mxu0 0
      %285 = vmatpush1.bf16.msra.mxu0 %v264
      %286 = vmatprep.subr.bf16.mxu0 0
      %287 = vmatpush1.bf16.msra.mxu0 %v265
      %288 = vmatprep.subr.bf16.mxu0 0
      %289 = vmatpush1.bf16.msra.mxu0 %v266
      %290 = vmatprep.subr.bf16.mxu0 0
      %291 = vmatpush1.bf16.msra.mxu0 %v267
      %292 = vmatprep.subr.bf16.mxu0 0
      %293 = vmatpush1.bf16.msra.mxu0 0
      %294 = vmatprep.subr.bf16.mxu0 0
      %295 = vmatpush1.bf16.msra.mxu0 0
      %296 = vmatprep.subr.bf16.mxu0 0
      %297 = vmatpush1.bf16.msra.mxu0 0
      %298 = vmatprep.subr.bf16.mxu0 0
      %299 = vmatpush1.bf16.msra.mxu0 0
      %300 = vmatprep.subr.bf16.mxu0 0
      %301 = vmatpush1.bf16.msra.mxu0 0
      %302 = vmatprep.subr.bf16.mxu0 0
      %303 = vmatpush1.bf16.msra.mxu0 0
      %304 = vmatprep.subr.bf16.mxu0 0
      %305 = vmatpush1.bf16.msra.mxu0 0
      %306 = vmatprep.subr.bf16.mxu0 0
      %307 = vmatpush1.bf16.msra.mxu0 0
      %308 = vmatprep.mubr.bf16.mxu0 0
      %309 = vmatmul.mubr.bf16.gmra.mrb[0].mxu0 %v212
      %v310 = vpop.f32.mrb[0].mxu0
      %v311 = vadd.f32 0.0, %v310
      %v312 = vpop.f32.mrb[0].mxu0
      %v313 = vpop.f32.mrb[0].mxu0
      %v314 = vadd.f32 0.0, %v313
      %v315 = vpop.f32.mrb[0].mxu0
      %316 = vmatprep.mubr.bf16.mxu0 0
      %317 = vmatmul.mubr.bf16.gmra.mrb[0].mxu0 %v213
      %v318 = vpop.f32.mrb[0].mxu0
      %v319 = vadd.f32 0.0, %v318
      %v320 = vpop.f32.mrb[0].mxu0
      %v321 = vpop.f32.mrb[0].mxu0
      %v322 = vadd.f32 0.0, %v321
      %v323 = vpop.f32.mrb[0].mxu0
      %324 = vmatprep.mubr.bf16.mxu0 0
      %325 = vmatmul.mubr.bf16.gmra.mrb[0].mxu0 %v214
      %v326 = vpop.f32.mrb[0].mxu0
      %v327 = vadd.f32 0.0, %v326
      %v328 = vpop.f32.mrb[0].mxu0
      %v329 = vpop.f32.mrb[0].mxu0
      %v330 = vadd.f32 0.0, %v329
      %v331 = vpop.f32.mrb[0].mxu0
      %332 = vmatprep.mubr.bf16.mxu0 0
      %333 = vmatmul.mubr.bf16.gmra.mrb[0].mxu0 %v215
      %v334 = vpop.f32.mrb[0].mxu0
      %v335 = vadd.f32 0.0, %v334
      %v336 = vpop.f32.mrb[0].mxu0
      %v337 = vpop.f32.mrb[0].mxu0
      %v338 = vadd.f32 0.0, %v337
      %v339 = vpop.f32.mrb[0].mxu0
      %340 = vmatprep.mubr.bf16.mxu0 0
      %341 = vmatmul.mubr.bf16.gmra.mrb[0].mxu0 %v216
      %v342 = vpop.f32.mrb[0].mxu0
      %v343 = vadd.f32 0.0, %v342
      %v344 = vpop.f32.mrb[0].mxu0
      %v345 = vpop.f32.mrb[0].mxu0
      %v346 = vadd.f32 0.0, %v345
      %v347 = vpop.f32.mrb[0].mxu0
      %348 = vmatprep.mubr.bf16.mxu0 0
      %349 = vmatmul.mubr.bf16.gmra.mrb[0].mxu0 %v217
      %v350 = vpop.f32.mrb[0].mxu0
      %v351 = vadd.f32 0.0, %v350
      %v352 = vpop.f32.mrb[0].mxu0
      %v353 = vpop.f32.mrb[0].mxu0
      %v354 = vadd.f32 0.0, %v353
      %v355 = vpop.f32.mrb[0].mxu0
      %356 = vmatprep.mubr.bf16.mxu0 0
      %357 = vmatmul.mubr.bf16.gmra.mrb[0].mxu0 %v218
      %v358 = vpop.f32.mrb[0].mxu0
      %v359 = vadd.f32 0.0, %v358
      %v360 = vpop.f32.mrb[0].mxu0
      %v361 = vpop.f32.mrb[0].mxu0
      %v362 = vadd.f32 0.0, %v361
      %v363 = vpop.f32.mrb[0].mxu0
      %364 = vmatprep.mubr.bf16.mxu0 0
      %365 = vmatmul.mubr.bf16.gmra.mrb[0].mxu0 %v219
      %v366 = vpop.f32.mrb[0].mxu0
      %v367 = vadd.f32 0.0, %v366
      %v368 = vpop.f32.mrb[0].mxu0
      %v369 = vpop.f32.mrb[0].mxu0
      %v370 = vadd.f32 0.0, %v369
      %v371 = vpop.f32.mrb[0].mxu0
      %372 = vdwg.mxu0
      %v373 = vpack.c.bf16 %v314, %v311
      %v374 = vpack.c.bf16 %v322, %v319
      %v375 = vpack.c.bf16 %v330, %v327
      %v376 = vpack.c.bf16 %v338, %v335
      %v377 = vpack.c.bf16 %v346, %v343
      %v378 = vpack.c.bf16 %v354, %v351
      %v379 = vpack.c.bf16 %v362, %v359
      %v380 = vpack.c.bf16 %v370, %v367
      %v389 = vunpack.c.l.b16 %v373
      %v390 = vunpack.c.h.b16 %v373
      %v391 = vunpack.c.l.b16 %v374
      %v392 = vunpack.c.h.b16 %v374
      %v393 = vunpack.c.l.b16 %v375
      %v394 = vunpack.c.h.b16 %v375
      %v395 = vunpack.c.l.b16 %v376
      %v396 = vunpack.c.h.b16 %v376
      %v397 = vunpack.c.l.b16 %v377
      %v398 = vunpack.c.h.b16 %v377
      %v399 = vunpack.c.l.b16 %v378
      %v400 = vunpack.c.h.b16 %v378
      %v401 = vunpack.c.l.b16 %v379
      %v402 = vunpack.c.h.b16 %v379
      %v403 = vunpack.c.l.b16 %v380
      %v404 = vunpack.c.h.b16 %v380
      %v405 = vpack.c.b16 %v389, %v389
      %v406 = vpack.c.b16 %v390, %v390
      %v407 = vpack.c.b16 %v391, %v391
      %v408 = vpack.c.b16 %v392, %v392
      %v409 = vpack.c.b16 %v393, %v393
      %v410 = vpack.c.b16 %v394, %v394
      %v411 = vpack.c.b16 %v395, %v395
      %v412 = vpack.c.b16 %v396, %v396
      %v413 = vpack.c.b16 %v397, %v397
      %v414 = vpack.c.b16 %v398, %v398
      %v415 = vpack.c.b16 %v399, %v399
      %v416 = vpack.c.b16 %v400, %v400
      %v417 = vpack.c.b16 %v401, %v401
      %v418 = vpack.c.b16 %v402, %v402
      %v419 = vpack.c.b16 %v403, %v403
      %v420 = vpack.c.b16 %v404, %v404
      %437 = vst [vmem:[%s145] sm:$0xf] %v405
      %438 = vst [vmem:[%s145 + $0x4] sm:$0xf] %v406
      %439 = vst [vmem:[%s145 + $0x8] sm:$0xf] %v407
      %440 = vst [vmem:[%s145 + $0xc] sm:$0xf] %v408
      %441 = vst [vmem:[%s145 + $0x10] sm:$0xf] %v409
      %442 = vst [vmem:[%s145 + $0x14] sm:$0xf] %v410
      %443 = vst [vmem:[%s145 + $0x18] sm:$0xf] %v411
      %444 = vst [vmem:[%s145 + $0x1c] sm:$0xf] %v412
      %445 = vst [vmem:[%s145 + $0x20] sm:$0xf] %v413
      %446 = vst [vmem:[%s145 + $0x24] sm:$0xf] %v414
      %447 = vst [vmem:[%s145 + $0x28] sm:$0xf] %v415
      %448 = vst [vmem:[%s145 + $0x2c] sm:$0xf] %v416
      %449 = vst [vmem:[%s145 + $0x30] sm:$0xf] %v417
      %450 = vst [vmem:[%s145 + $0x34] sm:$0xf] %v418
      %451 = vst [vmem:[%s145 + $0x38] sm:$0xf] %v419
      %452 = vst [vmem:[%s145 + $0x3c] sm:$0xf] %v420
      %s453 = smul.u32 16, %s13
      %p454 = scmp.lt.s32.totalorder %s453, 31
      %s455 = scalar_select %p454, %s453, 31
      %s456 = smul.addr %s455, 4
      %s457 = scalar_lea.vmem %s2, %s456
      // Predicated region
      $region29: #{a_call__.4} parent=27 // pred_check
        %p458 = pneg %p78
      $region30: #{a_call__.4} parent=27 // pred_check_branch
        %460 = sbr.rel (%p458) target = $region32
      $region31: #{a_call__.4} parent=27 // pred_region
        %s461 = smul.u32 16, %s13
      $region32: #{a_call__.4} parent=27 // pred_fallthru
        _
    $region28: #{a_call__.4} parent=5 // pred_fallthru
      _
    %p462 = scmp.le.s32.totalorder 2, %s8
    // Predicated region
    $region33: #{a_call__.4} parent=5 // pred_check
      %p463 = pneg %p462
    $region34: #{a_call__.4} parent=5 // pred_check_branch
      %465 = sbr.rel (%p463) target = $region36
    $region35: #{a_call__.4} parent=5 // pred_region
      %s466 = ssub.s32 %s8, 2
      // Predicated region
      $region37: #{a_call__.4} parent=35 // pred_check
        %p467 = pneg %p84
      $region38: #{a_call__.4} parent=35 // pred_check_branch
        %469 = sbr.rel (%p467) target = $region40
      $region39: #{a_call__.4} parent=35 // pred_region
        %s470 = smul.u32 16, %s14
        %p471 = scmp.lt.s32.totalorder %s470, 31
        %s472 = scalar_select %p471, %s470, 31
        %s473 = smul.addr %s472, 4
        %s474 = scalar_lea.vmem %s2, %s473
      $region40: #{a_call__.4} parent=35 // pred_fallthru
        _
    $region36: #{a_call__.4} parent=5 // pred_fallthru
      _
  $region6: #{a_call__.4} parent=0 // loop_footer
    %s12 = sadd.s32 1, %s8
  $region7: #{a_call__.4} parent=0 // loop_footer_branch
    %7 = sbr.rel target = $region3
  $region8: #{a_call__.4} parent=0 // loop_exit
    _

// kernel: a_call__.5
$region0: #{a_call__.5}
  #allocation0 [shape = 'u32[]', space=smem, size = 0x4, offset = 0x4, fixed_abs, tag = 'smem constant byte address 0x4 - core index']
  #allocation1 [shape = 'u32[144,128]{1,0:T(1,128)}', space=vmem, size = 0x12000, scoped, tag = 'internal scratch']
  #allocation2 [shape = 'f32[128,128]{1,0:T(8,128)}', space=vmem, size = 0x10000, scoped, tag = 'scratch operand']
  %s0 = inlined_call_operand.vmem [shape: bf16[256,256], index: 0, kind: input, shape index: {}]
  %s1 = inlined_call_operand.vmem [shape: bf16[256,128], index: 1, kind: input, shape index: {}]
  %s2 = inlined_call_operand.vmem [shape: f32[1,128], index: 2, kind: input, shape index: {}]
  %s3 = inlined_call_operand.vmem [shape: bf16[256,128], index: 3, kind: output, shape index: {}]
  %s4 = sld [smem:[#allocation0]]
  $region53: #{a_call__.5} parent=0
    _
  %s6 = ssub.s32 1, %s4
  %s7 = scalar_select 0, %s6, %s4
  loop: start=0, step=1, limit=4
  $region2: #{a_call__.5} parent=0 // loop_pre_header
    _
  $region3: #{a_call__.5} parent=0 // loop_header
    %s9 = sphi 0, %s13
    %p10 = scmp.ge.s32.totalorder %s9, 4
    %s16 = sphi 0, %s28
    %s17 = sphi 0, %s24
    %s18 = sphi 0, %s16
    %s19 = sphi 0, %s17
    %s20 = sphi 0, %s18
    %s21 = sphi 0, %s19
    %s33 = sphi 0, %s35
    %s36 = sphi 0, %s33
    %s37 = sphi 0, %s36
    %s53 = sphi 0, %s37
    %s59 = sphi 0, %s61
    %s62 = sphi 0, %s59
    %s63 = sphi 0, %s62
    %s79 = sphi 0, %s63
    %s83 = sphi 0, %s83
    %s85 = sphi 0, %s83
    %s86 = sphi 0, %s85
    %s100 = sphi 0, %s86
    %s106 = sphi 0, %s108
    %s109 = sphi 0, %s106
    %s110 = sphi 0, %s109
    %s126 = sphi 0, %s110
  $region4: #{a_call__.5} parent=0 // loop_header_branch
    %12 = sbr.rel (%p10) target = $region8
  $region5: #{a_call__.5} parent=0 // loop_body
    %s14 = ssub.s32 %s9, 1
    %s15 = ssub.s32 %s9, 2
    %s22 = sadd.s32 1, %s17
    %p23 = scmp.ge.s32.totalorder %s22, 1
    %s24 = scalar_select %p23, 0, %s22
    %s25 = sadd.s32 1, %s16
    %s26 = scalar_select %p23, %s25, %s16
    %p27 = scmp.ge.s32.totalorder %s26, 2
    %s28 = scalar_select %p27, 0, %s26
    %s29 = ssub.s32 %s16, %s28
    %s30 = ssub.s32 %s17, %s24
    %s31 = sor.u32 %s29, %s30
    %p32 = scmp.eq.s32.totalorder %s31, 0
    %s34 = sadd.s32 %s33, 1
    %s35 = scalar_select %p32, %s33, %s34
    %p38 = pneg %p32
    %p39 = scmp.eq.s32.totalorder %s9, 1
    %p40 = por %p38, %p39
    %p41 = scmp.ne.s32.totalorder %s33, %s36
    %p42 = scmp.eq.s32.totalorder %s9, 0
    %p43 = por %p41, %p42
    %p44 = scmp.ne.s32.totalorder %s33, %s36
    %p45 = scmp.eq.s32.totalorder %s14, 1
    %p46 = por %p44, %p45
    %p47 = scmp.ne.s32.totalorder %s36, %s37
    %p48 = scmp.eq.s32.totalorder %s14, 0
    %p49 = por %p47, %p48
    %p50 = scmp.ne.s32.totalorder %s36, %s37
    %p51 = scmp.eq.s32.totalorder %s15, 1
    %p52 = por %p50, %p51
    %p54 = scmp.ne.s32.totalorder %s37, %s53
    %p55 = scmp.eq.s32.totalorder %s15, 0
    %p56 = por %p54, %p55
    %s57 = ssub.s32 %s17, %s24
    %p58 = scmp.eq.s32.totalorder %s57, 0
    %s60 = sadd.s32 %s59, 1
    %s61 = scalar_select %p58, %s59, %s60
    %p64 = pneg %p58
    %p65 = scmp.eq.s32.totalorder %s9, 1
    %p66 = por %p64, %p65
    %p67 = scmp.ne.s32.totalorder %s59, %s62
    %p68 = scmp.eq.s32.totalorder %s9, 0
    %p69 = por %p67, %p68
    %p70 = scmp.ne.s32.totalorder %s59, %s62
    %p71 = scmp.eq.s32.totalorder %s14, 1
    %p72 = por %p70, %p71
    %p73 = scmp.ne.s32.totalorder %s62, %s63
    %p74 = scmp.eq.s32.totalorder %s14, 0
    %p75 = por %p73, %p74
    %p76 = scmp.ne.s32.totalorder %s62, %s63
    %p77 = scmp.eq.s32.totalorder %s15, 1
    %p78 = por %p76, %p77
    %p80 = scmp.ne.s32.totalorder %s63, %s79
    %p81 = scmp.eq.s32.totalorder %s15, 0
    %p82 = por %p80, %p81
    %s84 = sadd.s32 %s83, 1
    %p87 = scmp.eq.s32.totalorder %s9, 1
    %p88 = scmp.ne.s32.totalorder %s83, %s85
    %p89 = scmp.eq.s32.totalorder %s9, 0
    %p90 = por %p88, %p89
    %p91 = scmp.ne.s32.totalorder %s83, %s85
    %p92 = scmp.eq.s32.totalorder %s14, 1
    %p93 = por %p91, %p92
    %p94 = scmp.ne.s32.totalorder %s85, %s86
    %p95 = scmp.eq.s32.totalorder %s14, 0
    %p96 = por %p94, %p95
    %p97 = scmp.ne.s32.totalorder %s85, %s86
    %p98 = scmp.eq.s32.totalorder %s15, 1
    %p99 = por %p97, %p98
    %p101 = scmp.ne.s32.totalorder %s86, %s100
    %p102 = scmp.eq.s32.totalorder %s15, 0
    %p103 = por %p101, %p102
    %s104 = ssub.s32 %s16, %s28
    %p105 = scmp.eq.s32.totalorder %s104, 0
    %s107 = sadd.s32 %s106, 1
    %s108 = scalar_select %p105, %s106, %s107
    %p111 = pneg %p105
    %p112 = scmp.eq.s32.totalorder %s9, 1
    %p113 = por %p111, %p112
    %p114 = scmp.ne.s32.totalorder %s106, %s109
    %p115 = scmp.eq.s32.totalorder %s9, 0
    %p116 = por %p114, %p115
    %p117 = scmp.ne.s32.totalorder %s106, %s109
    %p118 = scmp.eq.s32.totalorder %s14, 1
    %p119 = por %p117, %p118
    %p120 = scmp.ne.s32.totalorder %s109, %s110
    %p121 = scmp.eq.s32.totalorder %s14, 0
    %p122 = por %p120, %p121
    %p123 = scmp.ne.s32.totalorder %s109, %s110
    %p124 = scmp.eq.s32.totalorder %s15, 1
    %p125 = por %p123, %p124
    %p127 = scmp.ne.s32.totalorder %s110, %s126
    %p128 = scmp.eq.s32.totalorder %s15, 0
    %p129 = por %p127, %p128
    %p130 = scmp.le.s32.totalorder 1, %s9
    %p131 = scmp.lt.s32.totalorder %s9, 3
    %p132 = pnand %p130, %p131
    %p133 = pneg %p132
    // Predicated region
    $region9: #{a_call__.5} parent=5 // pred_check
      _
    $region10: #{a_call__.5} parent=5 // pred_check_branch
      %135 = sbr.rel (%p132) target = $region12
    $region11: #{a_call__.5} parent=5 // pred_region
      %s136 = ssub.s32 %s9, 1
      // Predicated region
      $region13: #{a_call__.5} parent=11 // pred_check
        %p137 = pneg %p75
      $region14: #{a_call__.5} parent=11 // pred_check_branch
        %139 = sbr.rel (%p137) target = $region16
      $region15: #{a_call__.5} parent=11 // pred_region
        %s140 = smul.u32 32, %s19
        %p141 = scmp.lt.s32.totalorder %s140, 31
        %s142 = scalar_select %p141, %s140, 31
        %s143 = smul.addr %s142, 4
        %s144 = scalar_lea.vmem %s1, %s143
        %s145 = smul.u32 32, %s19
      $region16: #{a_call__.5} parent=11 // pred_fallthru
        _
      // Predicated region
      $region17: #{a_call__.5} parent=11 // pred_check
        %p146 = pneg %p96
      $region18: #{a_call__.5} parent=11 // pred_check_branch
        %148 = sbr.rel (%p146) target = $region20
      $region19: #{a_call__.5} parent=11 // pred_region
        _
      $region20: #{a_call__.5} parent=11 // pred_fallthru
        _
    $region12: #{a_call__.5} parent=5 // pred_fallthru
      _
    %p149 = scmp.lt.s32.totalorder %s9, 2
    // Predicated region
    $region21: #{a_call__.5} parent=5 // pred_check
      %p150 = pneg %p149
    $region22: #{a_call__.5} parent=5 // pred_check_branch
      %152 = sbr.rel (%p150) target = $region24
    $region23: #{a_call__.5} parent=5 // pred_region
      // Predicated region
      $region25: #{a_call__.5} parent=23 // pred_check
        %p153 = pneg %p43
      $region26: #{a_call__.5} parent=23 // pred_check_branch
        %155 = sbr.rel (%p153) target = $region28
      $region27: #{a_call__.5} parent=23 // pred_region
        %s156 = smul.u32 16, %s16
        %s157 = smul.u32 2, %s17
        %p158 = scmp.lt.s32.totalorder %s156, 31
        %s159 = scalar_select %p158, %s156, 31
        %p160 = scmp.lt.s32.totalorder %s157, 1
        %s161 = scalar_select %p160, %s157, 1
        %s162 = smul.addr %s159, 2
        %s163 = sadd.s32 %s161, %s162
        %s164 = smul.addr %s163, 4
        %s165 = scalar_lea.vmem %s0, %s164
        %s166 = smul.u32 16, %s16
        %s167 = smul.u32 2, %s17
      $region28: #{a_call__.5} parent=23 // pred_fallthru
        _
    $region24: #{a_call__.5} parent=5 // pred_fallthru
      _
    %p168 = scmp.le.s32.totalorder 1, %s9
    %p169 = scmp.lt.s32.totalorder %s9, 3
    %p170 = pnand %p168, %p169
    %p171 = pneg %p170
    // Predicated region
    $region29: #{a_call__.5} parent=5 // pred_check
      _
    $region30: #{a_call__.5} parent=5 // pred_check_branch
      %173 = sbr.rel (%p170) target = $region32
    $region31: #{a_call__.5} parent=5 // pred_region
      %s174 = ssub.s32 %s9, 1
      %s175 = smul.u32 16, %s18
      %s176 = smul.u32 2, %s19
      %p177 = scmp.lt.s32.totalorder %s175, 31
      %s178 = scalar_select %p177, %s175, 31
      %p179 = scmp.lt.s32.totalorder %s176, 1
      %s180 = scalar_select %p179, %s176, 1
      %s181 = smul.addr %s178, 2
      %s182 = sadd.s32 %s180, %s181
      %s183 = smul.addr %s182, 4
      %s184 = scalar_lea.vmem %s0, %s183
      %p185 = pneg %p49
      %p186 = pneg %p46
      %s187 = smul.u32 32, %s19
      %p188 = scmp.lt.s32.totalorder %s187, 31
      %s189 = scalar_select %p188, %s187, 31
      %s190 = smul.addr %s189, 4
      %s191 = scalar_lea.vmem %s1, %s190
      %p192 = pneg %p75
      %p193 = pneg %p72
      %p194 = pneg %p96
      %p195 = pneg %p93
      %p196 = pneg %p122
      %p197 = pneg %p119
      %s198 = smul.u32 16, %s18
      %p199 = scmp.lt.s32.totalorder %s198, 31
      %s200 = scalar_select %p199, %s198, 31
      %s201 = smul.addr %s200, 4
      %s202 = scalar_lea.vmem %s3, %s201
      %s203 = smul.u32 16, %s18
      %s204 = smul.u32 2, %s19
      %p205 = scmp.lt.s32.totalorder %s203, 31
      %s206 = scalar_select %p205, %s203, 31
      %p207 = scmp.lt.s32.totalorder %s204, 1
      %s208 = scalar_select %p207, %s204, 1
      %s209 = smul.addr %s206, 2
      %s210 = sadd.s32 %s208, %s209
      %s211 = smul.addr %s210, 4
      %s212 = scalar_lea.vmem %s0, %s211
      %s213 = smul.u32 16, %s18
      %s214 = smul.u32 2, %s19
      %s215 = smul.u32 32, %s19
      %p216 = scmp.lt.s32.totalorder %s215, 31
      %s217 = scalar_select %p216, %s215, 31
      %s218 = smul.addr %s217, 4
      %s219 = scalar_lea.vmem %s1, %s218
      %s220 = smul.u32 32, %s19
      %s221 = smul.u32 16, %s18
      %p222 = scmp.lt.s32.totalorder %s221, 31
      %s223 = scalar_select %p222, %s221, 31
      %s224 = smul.addr %s223, 4
      %s225 = scalar_lea.vmem %s3, %s224
      %s226 = smul.u32 16, %s18
      %p228 = scmp.eq.s32.totalorder %s19, 0
      // Predicated region
      $region33: #{a_call__.5} parent=31 // pred_check
        %p229 = pneg %p228
      $region34: #{a_call__.5} parent=31 // pred_check_branch
        %231 = sbr.rel (%p229) target = $region36
      $region35: #{a_call__.5} parent=31 // pred_region
        %232 = vst [vmem:[#allocation2] sm:$0xff] 0.0
        %233 = vst [vmem:[#allocation2 + $0x8] sm:$0xff] 0.0
        %234 = vst [vmem:[#allocation2 + $0x10] sm:$0xff] 0.0
        %235 = vst [vmem:[#allocation2 + $0x18] sm:$0xff] 0.0
        %236 = vst [vmem:[#allocation2 + $0x20] sm:$0xff] 0.0
        %237 = vst [vmem:[#allocation2 + $0x28] sm:$0xff] 0.0
        %238 = vst [vmem:[#allocation2 + $0x30] sm:$0xff] 0.0
        %239 = vst [vmem:[#allocation2 + $0x38] sm:$0xff] 0.0
        %240 = vst [vmem:[#allocation2 + $0x40] sm:$0xff] 0.0
        %241 = vst [vmem:[#allocation2 + $0x48] sm:$0xff] 0.0
        %242 = vst [vmem:[#allocation2 + $0x50] sm:$0xff] 0.0
        %243 = vst [vmem:[#allocation2 + $0x58] sm:$0xff] 0.0
        %244 = vst [vmem:[#allocation2 + $0x60] sm:$0xff] 0.0
        %245 = vst [vmem:[#allocation2 + $0x68] sm:$0xff] 0.0
        %246 = vst [vmem:[#allocation2 + $0x70] sm:$0xff] 0.0
        %247 = vst [vmem:[#allocation2 + $0x78] sm:$0xff] 0.0
      $region36: #{a_call__.5} parent=31 // pred_fallthru
        _
      %v248 = vld [vmem:[#allocation2] sm:$0xff]
      %v249 = vld [vmem:[#allocation2 + $0x8] sm:$0xff]
      %v250 = vld [vmem:[#allocation2 + $0x10] sm:$0xff]
      %v251 = vld [vmem:[#allocation2 + $0x18] sm:$0xff]
      %v252 = vld [vmem:[#allocation2 + $0x20] sm:$0xff]
      %v253 = vld [vmem:[#allocation2 + $0x28] sm:$0xff]
      %v254 = vld [vmem:[#allocation2 + $0x30] sm:$0xff]
      %v255 = vld [vmem:[#allocation2 + $0x38] sm:$0xff]
      %v256 = vld [vmem:[#allocation2 + $0x40] sm:$0xff]
      %v257 = vld [vmem:[#allocation2 + $0x48] sm:$0xff]
      %v258 = vld [vmem:[#allocation2 + $0x50] sm:$0xff]
      %v259 = vld [vmem:[#allocation2 + $0x58] sm:$0xff]
      %v260 = vld [vmem:[#allocation2 + $0x60] sm:$0xff]
      %v261 = vld [vmem:[#allocation2 + $0x68] sm:$0xff]
      %v262 = vld [vmem:[#allocation2 + $0x70] sm:$0xff]
      %v263 = vld [vmem:[#allocation2 + $0x78] sm:$0xff]
      %v264 = vld [vmem:[%s212] sm:$0xff]
      %v265 = vld [vmem:[%s212 + $0x8] sm:$0xff]
      %v266 = vld [vmem:[%s212 + $0x10] sm:$0xff]
      %v267 = vld [vmem:[%s212 + $0x18] sm:$0xff]
      %v268 = vld [vmem:[%s212 + $0x20] sm:$0xff]
      %v269 = vld [vmem:[%s212 + $0x28] sm:$0xff]
      %v270 = vld [vmem:[%s212 + $0x30] sm:$0xff]
      %v271 = vld [vmem:[%s212 + $0x38] sm:$0xff]
      %v272 = vld [vmem:[%s212 + $0x40] sm:$0xff]
      %v273 = vld [vmem:[%s212 + $0x48] sm:$0xff]
      %v274 = vld [vmem:[%s212 + $0x50] sm:$0xff]
      %v275 = vld [vmem:[%s212 + $0x58] sm:$0xff]
      %v276 = vld [vmem:[%s212 + $0x60] sm:$0xff]
      %v277 = vld [vmem:[%s212 + $0x68] sm:$0xff]
      %v278 = vld [vmem:[%s212 + $0x70] sm:$0xff]
      %v279 = vld [vmem:[%s212 + $0x78] sm:$0xff]
      %v280 = vld [vmem:[%s219] sm:$0xf]
      %v281 = vld [vmem:[%s219 + $0x4] sm:$0xf]
      %v282 = vld [vmem:[%s219 + $0x8] sm:$0xf]
      %v283 = vld [vmem:[%s219 + $0xc] sm:$0xf]
      %v284 = vld [vmem:[%s219 + $0x10] sm:$0xf]
      %v285 = vld [vmem:[%s219 + $0x14] sm:$0xf]
      %v286 = vld [vmem:[%s219 + $0x18] sm:$0xf]
      %v287 = vld [vmem:[%s219 + $0x1c] sm:$0xf]
      %v288 = vld [vmem:[%s219 + $0x20] sm:$0xf]
      %v289 = vld [vmem:[%s219 + $0x24] sm:$0xf]
      %v290 = vld [vmem:[%s219 + $0x28] sm:$0xf]
      %v291 = vld [vmem:[%s219 + $0x2c] sm:$0xf]
      %v292 = vld [vmem:[%s219 + $0x30] sm:$0xf]
      %v293 = vld [vmem:[%s219 + $0x34] sm:$0xf]
      %v294 = vld [vmem:[%s219 + $0x38] sm:$0xf]
      %v295 = vld [vmem:[%s219 + $0x3c] sm:$0xf]
      %v296 = vld [vmem:[%s219 + $0x40] sm:$0xf]
      %v297 = vld [vmem:[%s219 + $0x44] sm:$0xf]
      %v298 = vld [vmem:[%s219 + $0x48] sm:$0xf]
      %v299 = vld [vmem:[%s219 + $0x4c] sm:$0xf]
      %v300 = vld [vmem:[%s219 + $0x50] sm:$0xf]
      %v301 = vld [vmem:[%s219 + $0x54] sm:$0xf]
      %v302 = vld [vmem:[%s219 + $0x58] sm:$0xf]
      %v303 = vld [vmem:[%s219 + $0x5c] sm:$0xf]
      %v304 = vld [vmem:[%s219 + $0x60] sm:$0xf]
      %v305 = vld [vmem:[%s219 + $0x64] sm:$0xf]
      %v306 = vld [vmem:[%s219 + $0x68] sm:$0xf]
      %v307 = vld [vmem:[%s219 + $0x6c] sm:$0xf]
      %v308 = vld [vmem:[%s219 + $0x70] sm:$0xf]
      %v309 = vld [vmem:[%s219 + $0x74] sm:$0xf]
      %v310 = vld [vmem:[%s219 + $0x78] sm:$0xf]
      %v311 = vld [vmem:[%s219 + $0x7c] sm:$0xf]
      %v328 = vunpack.c.l.b16 %v264
      %v329 = vunpack.c.h.b16 %v264
      %v330 = vunpack.c.l.b16 %v265
      %v331 = vunpack.c.h.b16 %v265
      %v332 = vunpack.c.l.b16 %v266
      %v333 = vunpack.c.h.b16 %v266
      %v334 = vunpack.c.l.b16 %v267
      %v335 = vunpack.c.h.b16 %v267
      %v336 = vunpack.c.l.b16 %v268
      %v337 = vunpack.c.h.b16 %v268
      %v338 = vunpack.c.l.b16 %v269
      %v339 = vunpack.c.h.b16 %v269
      %v340 = vunpack.c.l.b16 %v270
      %v341 = vunpack.c.h.b16 %v270
      %v342 = vunpack.c.l.b16 %v271
      %v343 = vunpack.c.h.b16 %v271
      %v344 = vunpack.c.l.b16 %v272
      %v345 = vunpack.c.h.b16 %v272
      %v346 = vunpack.c.l.b16 %v273
      %v347 = vunpack.c.h.b16 %v273
      %v348 = vunpack.c.l.b16 %v274
      %v349 = vunpack.c.h.b16 %v274
      %v350 = vunpack.c.l.b16 %v275
      %v351 = vunpack.c.h.b16 %v275
      %v352 = vunpack.c.l.b16 %v276
      %v353 = vunpack.c.h.b16 %v276
      %v354 = vunpack.c.l.b16 %v277
      %v355 = vunpack.c.h.b16 %v277
      %v356 = vunpack.c.l.b16 %v278
      %v357 = vunpack.c.h.b16 %v278
      %v358 = vunpack.c.l.b16 %v279
      %v359 = vunpack.c.h.b16 %v279
      %v360 = vpack.c.b16 %v330, %v328
      %v361 = vpack.c.b16 %v331, %v329
      %v362 = vpack.c.b16 %v334, %v332
      %v363 = vpack.c.b16 %v335, %v333
      %v364 = vpack.c.b16 %v338, %v336
      %v365 = vpack.c.b16 %v339, %v337
      %v366 = vpack.c.b16 %v342, %v340
      %v367 = vpack.c.b16 %v343, %v341
      %v368 = vpack.c.b16 %v346, %v344
      %v369 = vpack.c.b16 %v347, %v345
      %v370 = vpack.c.b16 %v350, %v348
      %v371 = vpack.c.b16 %v351, %v349
      %v372 = vpack.c.b16 %v354, %v352
      %v373 = vpack.c.b16 %v355, %v353
      %v374 = vpack.c.b16 %v358, %v356
      %v375 = vpack.c.b16 %v359, %v357
      %v424 = vunpack.c.l.b16 %v280
      %v425 = vunpack.c.l.b16 %v281
      %v426 = vunpack.c.l.b16 %v282
      %v427 = vunpack.c.l.b16 %v283
      %v428 = vunpack.c.l.b16 %v284
      %v429 = vunpack.c.l.b16 %v285
      %v430 = vunpack.c.l.b16 %v286
      %v431 = vunpack.c.l.b16 %v287
      %v432 = vunpack.c.l.b16 %v288
      %v433 = vunpack.c.l.b16 %v289
      %v434 = vunpack.c.l.b16 %v290
      %v435 = vunpack.c.l.b16 %v291
      %v436 = vunpack.c.l.b16 %v292
      %v437 = vunpack.c.l.b16 %v293
      %v438 = vunpack.c.l.b16 %v294
      %v439 = vunpack.c.l.b16 %v295
      %v440 = vunpack.c.l.b16 %v296
      %v441 = vunpack.c.l.b16 %v297
      %v442 = vunpack.c.l.b16 %v298
      %v443 = vunpack.c.l.b16 %v299
      %v444 = vunpack.c.l.b16 %v300
      %v445 = vunpack.c.l.b16 %v301
      %v446 = vunpack.c.l.b16 %v302
      %v447 = vunpack.c.l.b16 %v303
      %v448 = vunpack.c.l.b16 %v304
      %v449 = vunpack.c.l.b16 %v305
      %v450 = vunpack.c.l.b16 %v306
      %v451 = vunpack.c.l.b16 %v307
      %v452 = vunpack.c.l.b16 %v308
      %v453 = vunpack.c.l.b16 %v309
      %v454 = vunpack.c.l.b16 %v310
      %v455 = vunpack.c.l.b16 %v311
      %v456 = vpack.c.b16 %v425, %v424
      %v457 = vpack.c.b16 %v427, %v426
      %v458 = vpack.c.b16 %v429, %v428
      %v459 = vpack.c.b16 %v431, %v430
      %v460 = vpack.c.b16 %v433, %v432
      %v461 = vpack.c.b16 %v435, %v434
      %v462 = vpack.c.b16 %v437, %v436
      %v463 = vpack.c.b16 %v439, %v438
      %v464 = vpack.c.b16 %v441, %v440
      %v465 = vpack.c.b16 %v443, %v442
      %v466 = vpack.c.b16 %v445, %v444
      %v467 = vpack.c.b16 %v447, %v446
      %v468 = vpack.c.b16 %v449, %v448
      %v469 = vpack.c.b16 %v451, %v450
      %v470 = vpack.c.b16 %v453, %v452
      %v471 = vpack.c.b16 %v455, %v454
      %488 = vmatprep.subr.bf16.mxu0 0
      %489 = vmatpush1.bf16.msra.mxu0 %v456
      %490 = vmatprep.subr.bf16.mxu0 0
      %491 = vmatpush1.bf16.msra.mxu0 %v457
      %492 = vmatprep.subr.bf16.mxu0 0
      %493 = vmatpush1.bf16.msra.mxu0 %v458
      %494 = vmatprep.subr.bf16.mxu0 0
      %495 = vmatpush1.bf16.msra.mxu0 %v459
      %496 = vmatprep.subr.bf16.mxu0 0
      %497 = vmatpush1.bf16.msra.mxu0 %v460
      %498 = vmatprep.subr.bf16.mxu0 0
      %499 = vmatpush1.bf16.msra.mxu0 %v461
      %500 = vmatprep.subr.bf16.mxu0 0
      %501 = vmatpush1.bf16.msra.mxu0 %v462
      %502 = vmatprep.subr.bf16.mxu0 0
      %503 = vmatpush1.bf16.msra.mxu0 %v463
      %504 = vmatprep.subr.bf16.mxu0 0
      %505 = vmatpush1.bf16.msra.mxu0 %v464
      %506 = vmatprep.subr.bf16.mxu0 0
      %507 = vmatpush1.bf16.msra.mxu0 %v465
      %508 = vmatprep.subr.bf16.mxu0 0
      %509 = vmatpush1.bf16.msra.mxu0 %v466
      %510 = vmatprep.subr.bf16.mxu0 0
      %511 = vmatpush1.bf16.msra.mxu0 %v467
      %512 = vmatprep.subr.bf16.mxu0 0
      %513 = vmatpush1.bf16.msra.mxu0 %v468
      %514 = vmatprep.subr.bf16.mxu0 0
      %515 = vmatpush1.bf16.msra.mxu0 %v469
      %516 = vmatprep.subr.bf16.mxu0 0
      %517 = vmatpush1.bf16.msra.mxu0 %v470
      %518 = vmatprep.subr.bf16.mxu0 0
      %519 = vmatpush1.bf16.msra.mxu0 %v471
      %520 = vmatprep.mubr.bf16.mxu0 %v361
      %521 = vmatmul.mubr.bf16.gmra.mrb[0].mxu0 %v360
      %v522 = vpop.f32.mrb[0].mxu0
      %v523 = vadd.f32 0.0, %v522
      %v524 = vpop.f32.mrb[0].mxu0
      %v525 = vpop.f32.mrb[0].mxu0
      %v526 = vadd.f32 0.0, %v525
      %v527 = vpop.f32.mrb[0].mxu0
      %528 = vmatprep.mubr.bf16.mxu0 %v363
      %529 = vmatmul.mubr.bf16.gmra.mrb[0].mxu0 %v362
      %v530 = vpop.f32.mrb[0].mxu0
      %v531 = vadd.f32 0.0, %v530
      %v532 = vpop.f32.mrb[0].mxu0
      %v533 = vpop.f32.mrb[0].mxu0
      %v534 = vadd.f32 0.0, %v533
      %v535 = vpop.f32.mrb[0].mxu0
      %536 = vmatprep.mubr.bf16.mxu0 %v365
      %537 = vmatmul.mubr.bf16.gmra.mrb[0].mxu0 %v364
      %v538 = vpop.f32.mrb[0].mxu0
      %v539 = vadd.f32 0.0, %v538
      %v540 = vpop.f32.mrb[0].mxu0
      %v541 = vpop.f32.mrb[0].mxu0
      %v542 = vadd.f32 0.0, %v541
      %v543 = vpop.f32.mrb[0].mxu0
      %544 = vmatprep.mubr.bf16.mxu0 %v367
      %545 = vmatmul.mubr.bf16.gmra.mrb[0].mxu0 %v366
      %v546 = vpop.f32.mrb[0].mxu0
      %v547 = vadd.f32 0.0, %v546
      %v548 = vpop.f32.mrb[0].mxu0
      %v549 = vpop.f32.mrb[0].mxu0
      %v550 = vadd.f32 0.0, %v549
      %v551 = vpop.f32.mrb[0].mxu0
      %552 = vmatprep.mubr.bf16.mxu0 %v369
      %553 = vmatmul.mubr.bf16.gmra.mrb[0].mxu0 %v368
      %v554 = vpop.f32.mrb[0].mxu0
      %v555 = vadd.f32 0.0, %v554
      %v556 = vpop.f32.mrb[0].mxu0
      %v557 = vpop.f32.mrb[0].mxu0
      %v558 = vadd.f32 0.0, %v557
      %v559 = vpop.f32.mrb[0].mxu0
      %560 = vmatprep.mubr.bf16.mxu0 %v371
      %561 = vmatmul.mubr.bf16.gmra.mrb[0].mxu0 %v370
      %v562 = vpop.f32.mrb[0].mxu0
      %v563 = vadd.f32 0.0, %v562
      %v564 = vpop.f32.mrb[0].mxu0
      %v565 = vpop.f32.mrb[0].mxu0
      %v566 = vadd.f32 0.0, %v565
      %v567 = vpop.f32.mrb[0].mxu0
      %568 = vmatprep.mubr.bf16.mxu0 %v373
      %569 = vmatmul.mubr.bf16.gmra.mrb[0].mxu0 %v372
      %v570 = vpop.f32.mrb[0].mxu0
      %v571 = vadd.f32 0.0, %v570
      %v572 = vpop.f32.mrb[0].mxu0
      %v573 = vpop.f32.mrb[0].mxu0
      %v574 = vadd.f32 0.0, %v573
      %v575 = vpop.f32.mrb[0].mxu0
      %576 = vmatprep.mubr.bf16.mxu0 %v375
      %577 = vmatmul.mubr.bf16.gmra.mrb[0].mxu0 %v374
      %v578 = vpop.f32.mrb[0].mxu0
      %v579 = vadd.f32 0.0, %v578
      %v580 = vpop.f32.mrb[0].mxu0
      %v581 = vpop.f32.mrb[0].mxu0
      %v582 = vadd.f32 0.0, %v581
      %v583 = vpop.f32.mrb[0].mxu0
      %584 = vdwg.mxu0
      %v585 = vadd.f32 %v248, %v523
      %v586 = vadd.f32 %v249, %v526
      %v587 = vadd.f32 %v250, %v531
      %v588 = vadd.f32 %v251, %v534
      %v589 = vadd.f32 %v252, %v539
      %v590 = vadd.f32 %v253, %v542
      %v591 = vadd.f32 %v254, %v547
      %v592 = vadd.f32 %v255, %v550
      %v593 = vadd.f32 %v256, %v555
      %v594 = vadd.f32 %v257, %v558
      %v595 = vadd.f32 %v258, %v563
      %v596 = vadd.f32 %v259, %v566
      %v597 = vadd.f32 %v260, %v571
      %v598 = vadd.f32 %v261, %v574
      %v599 = vadd.f32 %v262, %v579
      %v600 = vadd.f32 %v263, %v582
      %601 = vst [vmem:[#allocation2] sm:$0xff] %v585
      %602 = vst [vmem:[#allocation2 + $0x8] sm:$0xff] %v586
      %603 = vst [vmem:[#allocation2 + $0x10] sm:$0xff] %v587
      %604 = vst [vmem:[#allocation2 + $0x18] sm:$0xff] %v588
      %605 = vst [vmem:[#allocation2 + $0x20] sm:$0xff] %v589
      %606 = vst [vmem:[#allocation2 + $0x28] sm:$0xff] %v590
      %607 = vst [vmem:[#allocation2 + $0x30] sm:$0xff] %v591
      %608 = vst [vmem:[#allocation2 + $0x38] sm:$0xff] %v592
      %609 = vst [vmem:[#allocation2 + $0x40] sm:$0xff] %v593
      %610 = vst [vmem:[#allocation2 + $0x48] sm:$0xff] %v594
      %611 = vst [vmem:[#allocation2 + $0x50] sm:$0xff] %v595
      %612 = vst [vmem:[#allocation2 + $0x58] sm:$0xff] %v596
      %613 = vst [vmem:[#allocation2 + $0x60] sm:$0xff] %v597
      %614 = vst [vmem:[#allocation2 + $0x68] sm:$0xff] %v598
      %615 = vst [vmem:[#allocation2 + $0x70] sm:$0xff] %v599
      %616 = vst [vmem:[#allocation2 + $0x78] sm:$0xff] %v600
      // Predicated region
      $region37: #{a_call__.5} parent=31 // pred_check
        %p617 = pneg %p228
      $region38: #{a_call__.5} parent=31 // pred_check_branch
        %619 = sbr.rel (%p617) target = $region40
      $region39: #{a_call__.5} parent=31 // pred_region
        %v620 = vld [vmem:[#allocation2] sm:$0xff]
        %v621 = vld [vmem:[#allocation2 + $0x8] sm:$0xff]
        %v622 = vld [vmem:[#allocation2 + $0x10] sm:$0xff]
        %v623 = vld [vmem:[#allocation2 + $0x18] sm:$0xff]
        %v624 = vld [vmem:[#allocation2 + $0x20] sm:$0xff]
        %v625 = vld [vmem:[#allocation2 + $0x28] sm:$0xff]
        %v626 = vld [vmem:[#allocation2 + $0x30] sm:$0xff]
        %v627 = vld [vmem:[#allocation2 + $0x38] sm:$0xff]
        %v628 = vld [vmem:[#allocation2 + $0x40] sm:$0xff]
        %v629 = vld [vmem:[#allocation2 + $0x48] sm:$0xff]
        %v630 = vld [vmem:[#allocation2 + $0x50] sm:$0xff]
        %v631 = vld [vmem:[#allocation2 + $0x58] sm:$0xff]
        %v632 = vld [vmem:[#allocation2 + $0x60] sm:$0xff]
        %v633 = vld [vmem:[#allocation2 + $0x68] sm:$0xff]
        %v634 = vld [vmem:[#allocation2 + $0x70] sm:$0xff]
        %v635 = vld [vmem:[#allocation2 + $0x78] sm:$0xff]
        %v636 = vld [vmem:[%s2] sm:$0x1]
        %v638 = vlaneseq
        %v639 = vshrl.u32 %v638, 7
        %v640 = vsub.s32 0, %v639
        %v641 = vrot.slane %v636, %v640
        %v643 = vadd.f32 %v620, %v641
        %v644 = vadd.f32 %v621, %v641
        %v645 = vadd.f32 %v622, %v641
        %v646 = vadd.f32 %v623, %v641
        %v647 = vadd.f32 %v624, %v641
        %v648 = vadd.f32 %v625, %v641
        %v649 = vadd.f32 %v626, %v641
        %v650 = vadd.f32 %v627, %v641
        %v651 = vadd.f32 %v628, %v641
        %v652 = vadd.f32 %v629, %v641
        %v653 = vadd.f32 %v630, %v641
        %v654 = vadd.f32 %v631, %v641
        %v655 = vadd.f32 %v632, %v641
        %v656 = vadd.f32 %v633, %v641
        %v657 = vadd.f32 %v634, %v641
        %v658 = vadd.f32 %v635, %v641
        %v659 = vmax.f32 %v643, 0.0
        %v660 = vmax.f32 %v644, 0.0
        %v661 = vmax.f32 %v645, 0.0
        %v662 = vmax.f32 %v646, 0.0
        %v663 = vmax.f32 %v647, 0.0
        %v664 = vmax.f32 %v648, 0.0
        %v665 = vmax.f32 %v649, 0.0
        %v666 = vmax.f32 %v650, 0.0
        %v667 = vmax.f32 %v651, 0.0
        %v668 = vmax.f32 %v652, 0.0
        %v669 = vmax.f32 %v653, 0.0
        %v670 = vmax.f32 %v654, 0.0
        %v671 = vmax.f32 %v655, 0.0
        %v672 = vmax.f32 %v656, 0.0
        %v673 = vmax.f32 %v657, 0.0
        %v674 = vmax.f32 %v658, 0.0
        %v675 = vpack.c.bf16 %v660, %v659
        %v676 = vpack.c.bf16 %v662, %v661
        %v677 = vpack.c.bf16 %v664, %v663
        %v678 = vpack.c.bf16 %v666, %v665
        %v679 = vpack.c.bf16 %v668, %v667
        %v680 = vpack.c.bf16 %v670, %v669
        %v681 = vpack.c.bf16 %v672, %v671
        %v682 = vpack.c.bf16 %v674, %v673
        %v691 = vunpack.c.l.b16 %v675
        %v692 = vunpack.c.h.b16 %v675
        %v693 = vunpack.c.l.b16 %v676
        %v694 = vunpack.c.h.b16 %v676
        %v695 = vunpack.c.l.b16 %v677
        %v696 = vunpack.c.h.b16 %v677
        %v697 = vunpack.c.l.b16 %v678
        %v698 = vunpack.c.h.b16 %v678
        %v699 = vunpack.c.l.b16 %v679
        %v700 = vunpack.c.h.b16 %v679
        %v701 = vunpack.c.l.b16 %v680
        %v702 = vunpack.c.h.b16 %v680
        %v703 = vunpack.c.l.b16 %v681
        %v704 = vunpack.c.h.b16 %v681
        %v705 = vunpack.c.l.b16 %v682
        %v706 = vunpack.c.h.b16 %v682
        %v707 = vpack.c.b16 %v691, %v691
        %v708 = vpack.c.b16 %v692, %v692
        %v709 = vpack.c.b16 %v693, %v693
        %v710 = vpack.c.b16 %v694, %v694
        %v711 = vpack.c.b16 %v695, %v695
        %v712 = vpack.c.b16 %v696, %v696
        %v713 = vpack.c.b16 %v697, %v697
        %v714 = vpack.c.b16 %v698, %v698
        %v715 = vpack.c.b16 %v699, %v699
        %v716 = vpack.c.b16 %v700, %v700
        %v717 = vpack.c.b16 %v701, %v701
        %v718 = vpack.c.b16 %v702, %v702
        %v719 = vpack.c.b16 %v703, %v703
        %v720 = vpack.c.b16 %v704, %v704
        %v721 = vpack.c.b16 %v705, %v705
        %v722 = vpack.c.b16 %v706, %v706
        %739 = vst [vmem:[%s225] sm:$0xf] %v707
        %740 = vst [vmem:[%s225 + $0x4] sm:$0xf] %v708
        %741 = vst [vmem:[%s225 + $0x8] sm:$0xf] %v709
        %742 = vst [vmem:[%s225 + $0xc] sm:$0xf] %v710
        %743 = vst [vmem:[%s225 + $0x10] sm:$0xf] %v711
        %744 = vst [vmem:[%s225 + $0x14] sm:$0xf] %v712
        %745 = vst [vmem:[%s225 + $0x18] sm:$0xf] %v713
        %746 = vst [vmem:[%s225 + $0x1c] sm:$0xf] %v714
        %747 = vst [vmem:[%s225 + $0x20] sm:$0xf] %v715
        %748 = vst [vmem:[%s225 + $0x24] sm:$0xf] %v716
        %749 = vst [vmem:[%s225 + $0x28] sm:$0xf] %v717
        %750 = vst [vmem:[%s225 + $0x2c] sm:$0xf] %v718
        %751 = vst [vmem:[%s225 + $0x30] sm:$0xf] %v719
        %752 = vst [vmem:[%s225 + $0x34] sm:$0xf] %v720
        %753 = vst [vmem:[%s225 + $0x38] sm:$0xf] %v721
        %754 = vst [vmem:[%s225 + $0x3c] sm:$0xf] %v722
      $region40: #{a_call__.5} parent=31 // pred_fallthru
        _
      %s755 = smul.u32 16, %s18
      %p756 = scmp.lt.s32.totalorder %s755, 31
      %s757 = scalar_select %p756, %s755, 31
      %s758 = smul.addr %s757, 4
      %s759 = scalar_lea.vmem %s3, %s758
      // Predicated region
      $region41: #{a_call__.5} parent=31 // pred_check
        %p760 = pneg %p119
      $region42: #{a_call__.5} parent=31 // pred_check_branch
        %762 = sbr.rel (%p760) target = $region44
      $region43: #{a_call__.5} parent=31 // pred_region
        %s763 = smul.u32 16, %s18
      $region44: #{a_call__.5} parent=31 // pred_fallthru
        _
    $region32: #{a_call__.5} parent=5 // pred_fallthru
      _
    %p764 = scmp.le.s32.totalorder 2, %s9
    // Predicated region
    $region45: #{a_call__.5} parent=5 // pred_check
      %p765 = pneg %p764
    $region46: #{a_call__.5} parent=5 // pred_check_branch
      %767 = sbr.rel (%p765) target = $region48
    $region47: #{a_call__.5} parent=5 // pred_region
      %s768 = ssub.s32 %s9, 2
      // Predicated region
      $region49: #{a_call__.5} parent=47 // pred_check
        %p769 = pneg %p125
      $region50: #{a_call__.5} parent=47 // pred_check_branch
        %771 = sbr.rel (%p769) target = $region52
      $region51: #{a_call__.5} parent=47 // pred_region
        %s772 = smul.u32 16, %s20
        %p773 = scmp.lt.s32.totalorder %s772, 31
        %s774 = scalar_select %p773, %s772, 31
        %s775 = smul.addr %s774, 4
        %s776 = scalar_lea.vmem %s3, %s775
      $region52: #{a_call__.5} parent=47 // pred_fallthru
        _
    $region48: #{a_call__.5} parent=5 // pred_fallthru
      _
  $region6: #{a_call__.5} parent=0 // loop_footer
    %s13 = sadd.s32 1, %s9
  $region7: #{a_call__.5} parent=0 // loop_footer_branch
    %8 = sbr.rel target = $region3
  $region8: #{a_call__.5} parent=0 // loop_exit
    _

// kernel: a_call__.7
$region0: #{a_call__.7}
  #allocation0 [shape = 'u32[]', space=smem, size = 0x4, offset = 0x4, fixed_abs, tag = 'smem constant byte address 0x4 - core index']
  #allocation1 [shape = 'u32[144,128]{1,0:T(1,128)}', space=vmem, size = 0x12000, scoped, tag = 'internal scratch']
  #allocation2 [shape = 'f32[128,128]{1,0:T(8,128)}', space=vmem, size = 0x10000, scoped, tag = 'scratch operand']
  %s0 = inlined_call_operand.vmem [shape: bf16[256,256], index: 0, kind: input, shape index: {}]
  %s1 = inlined_call_operand.vmem [shape: bf16[256,128], index: 1, kind: input, shape index: {}]
  %s2 = inlined_call_operand.vmem [shape: f32[1,128], index: 2, kind: input, shape index: {}]
  %s3 = inlined_call_operand.vmem [shape: f32[256,128], index: 3, kind: output, shape index: {}]
  %s4 = sld [smem:[#allocation0]]
  $region53: #{a_call__.7} parent=0
    _
  %s6 = ssub.s32 1, %s4
  %s7 = scalar_select 0, %s6, %s4
  loop: start=0, step=1, limit=4
  $region2: #{a_call__.7} parent=0 // loop_pre_header
    _
  $region3: #{a_call__.7} parent=0 // loop_header
    %s9 = sphi 0, %s13
    %p10 = scmp.ge.s32.totalorder %s9, 4
    %s16 = sphi 0, %s28
    %s17 = sphi 0, %s24
    %s18 = sphi 0, %s16
    %s19 = sphi 0, %s17
    %s20 = sphi 0, %s18
    %s21 = sphi 0, %s19
    %s33 = sphi 0, %s35
    %s36 = sphi 0, %s33
    %s37 = sphi 0, %s36
    %s53 = sphi 0, %s37
    %s59 = sphi 0, %s61
    %s62 = sphi 0, %s59
    %s63 = sphi 0, %s62
    %s79 = sphi 0, %s63
    %s83 = sphi 0, %s83
    %s85 = sphi 0, %s83
    %s86 = sphi 0, %s85
    %s100 = sphi 0, %s86
    %s106 = sphi 0, %s108
    %s109 = sphi 0, %s106
    %s110 = sphi 0, %s109
    %s126 = sphi 0, %s110
  $region4: #{a_call__.7} parent=0 // loop_header_branch
    %12 = sbr.rel (%p10) target = $region8
  $region5: #{a_call__.7} parent=0 // loop_body
    %s14 = ssub.s32 %s9, 1
    %s15 = ssub.s32 %s9, 2
    %s22 = sadd.s32 1, %s17
    %p23 = scmp.ge.s32.totalorder %s22, 1
    %s24 = scalar_select %p23, 0, %s22
    %s25 = sadd.s32 1, %s16
    %s26 = scalar_select %p23, %s25, %s16
    %p27 = scmp.ge.s32.totalorder %s26, 2
    %s28 = scalar_select %p27, 0, %s26
    %s29 = ssub.s32 %s16, %s28
    %s30 = ssub.s32 %s17, %s24
    %s31 = sor.u32 %s29, %s30
    %p32 = scmp.eq.s32.totalorder %s31, 0
    %s34 = sadd.s32 %s33, 1
    %s35 = scalar_select %p32, %s33, %s34
    %p38 = pneg %p32
    %p39 = scmp.eq.s32.totalorder %s9, 1
    %p40 = por %p38, %p39
    %p41 = scmp.ne.s32.totalorder %s33, %s36
    %p42 = scmp.eq.s32.totalorder %s9, 0
    %p43 = por %p41, %p42
    %p44 = scmp.ne.s32.totalorder %s33, %s36
    %p45 = scmp.eq.s32.totalorder %s14, 1
    %p46 = por %p44, %p45
    %p47 = scmp.ne.s32.totalorder %s36, %s37
    %p48 = scmp.eq.s32.totalorder %s14, 0
    %p49 = por %p47, %p48
    %p50 = scmp.ne.s32.totalorder %s36, %s37
    %p51 = scmp.eq.s32.totalorder %s15, 1
    %p52 = por %p50, %p51
    %p54 = scmp.ne.s32.totalorder %s37, %s53
    %p55 = scmp.eq.s32.totalorder %s15, 0
    %p56 = por %p54, %p55
    %s57 = ssub.s32 %s17, %s24
    %p58 = scmp.eq.s32.totalorder %s57, 0
    %s60 = sadd.s32 %s59, 1
    %s61 = scalar_select %p58, %s59, %s60
    %p64 = pneg %p58
    %p65 = scmp.eq.s32.totalorder %s9, 1
    %p66 = por %p64, %p65
    %p67 = scmp.ne.s32.totalorder %s59, %s62
    %p68 = scmp.eq.s32.totalorder %s9, 0
    %p69 = por %p67, %p68
    %p70 = scmp.ne.s32.totalorder %s59, %s62
    %p71 = scmp.eq.s32.totalorder %s14, 1
    %p72 = por %p70, %p71
    %p73 = scmp.ne.s32.totalorder %s62, %s63
    %p74 = scmp.eq.s32.totalorder %s14, 0
    %p75 = por %p73, %p74
    %p76 = scmp.ne.s32.totalorder %s62, %s63
    %p77 = scmp.eq.s32.totalorder %s15, 1
    %p78 = por %p76, %p77
    %p80 = scmp.ne.s32.totalorder %s63, %s79
    %p81 = scmp.eq.s32.totalorder %s15, 0
    %p82 = por %p80, %p81
    %s84 = sadd.s32 %s83, 1
    %p87 = scmp.eq.s32.totalorder %s9, 1
    %p88 = scmp.ne.s32.totalorder %s83, %s85
    %p89 = scmp.eq.s32.totalorder %s9, 0
    %p90 = por %p88, %p89
    %p91 = scmp.ne.s32.totalorder %s83, %s85
    %p92 = scmp.eq.s32.totalorder %s14, 1
    %p93 = por %p91, %p92
    %p94 = scmp.ne.s32.totalorder %s85, %s86
    %p95 = scmp.eq.s32.totalorder %s14, 0
    %p96 = por %p94, %p95
    %p97 = scmp.ne.s32.totalorder %s85, %s86
    %p98 = scmp.eq.s32.totalorder %s15, 1
    %p99 = por %p97, %p98
    %p101 = scmp.ne.s32.totalorder %s86, %s100
    %p102 = scmp.eq.s32.totalorder %s15, 0
    %p103 = por %p101, %p102
    %s104 = ssub.s32 %s16, %s28
    %p105 = scmp.eq.s32.totalorder %s104, 0
    %s107 = sadd.s32 %s106, 1
    %s108 = scalar_select %p105, %s106, %s107
    %p111 = pneg %p105
    %p112 = scmp.eq.s32.totalorder %s9, 1
    %p113 = por %p111, %p112
    %p114 = scmp.ne.s32.totalorder %s106, %s109
    %p115 = scmp.eq.s32.totalorder %s9, 0
    %p116 = por %p114, %p115
    %p117 = scmp.ne.s32.totalorder %s106, %s109
    %p118 = scmp.eq.s32.totalorder %s14, 1
    %p119 = por %p117, %p118
    %p120 = scmp.ne.s32.totalorder %s109, %s110
    %p121 = scmp.eq.s32.totalorder %s14, 0
    %p122 = por %p120, %p121
    %p123 = scmp.ne.s32.totalorder %s109, %s110
    %p124 = scmp.eq.s32.totalorder %s15, 1
    %p125 = por %p123, %p124
    %p127 = scmp.ne.s32.totalorder %s110, %s126
    %p128 = scmp.eq.s32.totalorder %s15, 0
    %p129 = por %p127, %p128
    %p130 = scmp.le.s32.totalorder 1, %s9
    %p131 = scmp.lt.s32.totalorder %s9, 3
    %p132 = pnand %p130, %p131
    %p133 = pneg %p132
    // Predicated region
    $region9: #{a_call__.7} parent=5 // pred_check
      _
    $region10: #{a_call__.7} parent=5 // pred_check_branch
      %135 = sbr.rel (%p132) target = $region12
    $region11: #{a_call__.7} parent=5 // pred_region
      %s136 = ssub.s32 %s9, 1
      // Predicated region
      $region13: #{a_call__.7} parent=11 // pred_check
        %p137 = pneg %p75
      $region14: #{a_call__.7} parent=11 // pred_check_branch
        %139 = sbr.rel (%p137) target = $region16
      $region15: #{a_call__.7} parent=11 // pred_region
        %s140 = smul.u32 32, %s19
        %p141 = scmp.lt.s32.totalorder %s140, 31
        %s142 = scalar_select %p141, %s140, 31
        %s143 = smul.addr %s142, 4
        %s144 = scalar_lea.vmem %s1, %s143
        %s145 = smul.u32 32, %s19
      $region16: #{a_call__.7} parent=11 // pred_fallthru
        _
      // Predicated region
      $region17: #{a_call__.7} parent=11 // pred_check
        %p146 = pneg %p96
      $region18: #{a_call__.7} parent=11 // pred_check_branch
        %148 = sbr.rel (%p146) target = $region20
      $region19: #{a_call__.7} parent=11 // pred_region
        _
      $region20: #{a_call__.7} parent=11 // pred_fallthru
        _
    $region12: #{a_call__.7} parent=5 // pred_fallthru
      _
    %p149 = scmp.lt.s32.totalorder %s9, 2
    // Predicated region
    $region21: #{a_call__.7} parent=5 // pred_check
      %p150 = pneg %p149
    $region22: #{a_call__.7} parent=5 // pred_check_branch
      %152 = sbr.rel (%p150) target = $region24
    $region23: #{a_call__.7} parent=5 // pred_region
      // Predicated region
      $region25: #{a_call__.7} parent=23 // pred_check
        %p153 = pneg %p43
      $region26: #{a_call__.7} parent=23 // pred_check_branch
        %155 = sbr.rel (%p153) target = $region28
      $region27: #{a_call__.7} parent=23 // pred_region
        %s156 = smul.u32 16, %s16
        %s157 = smul.u32 2, %s17
        %p158 = scmp.lt.s32.totalorder %s156, 31
        %s159 = scalar_select %p158, %s156, 31
        %p160 = scmp.lt.s32.totalorder %s157, 1
        %s161 = scalar_select %p160, %s157, 1
        %s162 = smul.addr %s159, 2
        %s163 = sadd.s32 %s161, %s162
        %s164 = smul.addr %s163, 4
        %s165 = scalar_lea.vmem %s0, %s164
        %s166 = smul.u32 16, %s16
        %s167 = smul.u32 2, %s17
      $region28: #{a_call__.7} parent=23 // pred_fallthru
        _
    $region24: #{a_call__.7} parent=5 // pred_fallthru
      _
    %p168 = scmp.le.s32.totalorder 1, %s9
    %p169 = scmp.lt.s32.totalorder %s9, 3
    %p170 = pnand %p168, %p169
    %p171 = pneg %p170
    // Predicated region
    $region29: #{a_call__.7} parent=5 // pred_check
      _
    $region30: #{a_call__.7} parent=5 // pred_check_branch
      %173 = sbr.rel (%p170) target = $region32
    $region31: #{a_call__.7} parent=5 // pred_region
      %s174 = ssub.s32 %s9, 1
      %s175 = smul.u32 16, %s18
      %s176 = smul.u32 2, %s19
      %p177 = scmp.lt.s32.totalorder %s175, 31
      %s178 = scalar_select %p177, %s175, 31
      %p179 = scmp.lt.s32.totalorder %s176, 1
      %s180 = scalar_select %p179, %s176, 1
      %s181 = smul.addr %s178, 2
      %s182 = sadd.s32 %s180, %s181
      %s183 = smul.addr %s182, 4
      %s184 = scalar_lea.vmem %s0, %s183
      %p185 = pneg %p49
      %p186 = pneg %p46
      %s187 = smul.u32 32, %s19
      %p188 = scmp.lt.s32.totalorder %s187, 31
      %s189 = scalar_select %p188, %s187, 31
      %s190 = smul.addr %s189, 4
      %s191 = scalar_lea.vmem %s1, %s190
      %p192 = pneg %p75
      %p193 = pneg %p72
      %p194 = pneg %p96
      %p195 = pneg %p93
      %p196 = pneg %p122
      %p197 = pneg %p119
      %s198 = smul.u32 16, %s18
      %p199 = scmp.lt.s32.totalorder %s198, 31
      %s200 = scalar_select %p199, %s198, 31
      %s201 = smul.addr %s200, 8
      %s202 = scalar_lea.vmem %s3, %s201
      %s203 = smul.u32 16, %s18
      %s204 = smul.u32 2, %s19
      %p205 = scmp.lt.s32.totalorder %s203, 31
      %s206 = scalar_select %p205, %s203, 31
      %p207 = scmp.lt.s32.totalorder %s204, 1
      %s208 = scalar_select %p207, %s204, 1
      %s209 = smul.addr %s206, 2
      %s210 = sadd.s32 %s208, %s209
      %s211 = smul.addr %s210, 4
      %s212 = scalar_lea.vmem %s0, %s211
      %s213 = smul.u32 16, %s18
      %s214 = smul.u32 2, %s19
      %s215 = smul.u32 32, %s19
      %p216 = scmp.lt.s32.totalorder %s215, 31
      %s217 = scalar_select %p216, %s215, 31
      %s218 = smul.addr %s217, 4
      %s219 = scalar_lea.vmem %s1, %s218
      %s220 = smul.u32 32, %s19
      %s221 = smul.u32 16, %s18
      %p222 = scmp.lt.s32.totalorder %s221, 31
      %s223 = scalar_select %p222, %s221, 31
      %s224 = smul.addr %s223, 8
      %s225 = scalar_lea.vmem %s3, %s224
      %s226 = smul.u32 16, %s18
      %p228 = scmp.eq.s32.totalorder %s19, 0
      // Predicated region
      $region33: #{a_call__.7} parent=31 // pred_check
        %p229 = pneg %p228
      $region34: #{a_call__.7} parent=31 // pred_check_branch
        %231 = sbr.rel (%p229) target = $region36
      $region35: #{a_call__.7} parent=31 // pred_region
        %232 = vst [vmem:[#allocation2] sm:$0xff] 0.0
        %233 = vst [vmem:[#allocation2 + $0x8] sm:$0xff] 0.0
        %234 = vst [vmem:[#allocation2 + $0x10] sm:$0xff] 0.0
        %235 = vst [vmem:[#allocation2 + $0x18] sm:$0xff] 0.0
        %236 = vst [vmem:[#allocation2 + $0x20] sm:$0xff] 0.0
        %237 = vst [vmem:[#allocation2 + $0x28] sm:$0xff] 0.0
        %238 = vst [vmem:[#allocation2 + $0x30] sm:$0xff] 0.0
        %239 = vst [vmem:[#allocation2 + $0x38] sm:$0xff] 0.0
        %240 = vst [vmem:[#allocation2 + $0x40] sm:$0xff] 0.0
        %241 = vst [vmem:[#allocation2 + $0x48] sm:$0xff] 0.0
        %242 = vst [vmem:[#allocation2 + $0x50] sm:$0xff] 0.0
        %243 = vst [vmem:[#allocation2 + $0x58] sm:$0xff] 0.0
        %244 = vst [vmem:[#allocation2 + $0x60] sm:$0xff] 0.0
        %245 = vst [vmem:[#allocation2 + $0x68] sm:$0xff] 0.0
        %246 = vst [vmem:[#allocation2 + $0x70] sm:$0xff] 0.0
        %247 = vst [vmem:[#allocation2 + $0x78] sm:$0xff] 0.0
      $region36: #{a_call__.7} parent=31 // pred_fallthru
        _
      %v248 = vld [vmem:[#allocation2] sm:$0xff]
      %v249 = vld [vmem:[#allocation2 + $0x8] sm:$0xff]
      %v250 = vld [vmem:[#allocation2 + $0x10] sm:$0xff]
      %v251 = vld [vmem:[#allocation2 + $0x18] sm:$0xff]
      %v252 = vld [vmem:[#allocation2 + $0x20] sm:$0xff]
      %v253 = vld [vmem:[#allocation2 + $0x28] sm:$0xff]
      %v254 = vld [vmem:[#allocation2 + $0x30] sm:$0xff]
      %v255 = vld [vmem:[#allocation2 + $0x38] sm:$0xff]
      %v256 = vld [vmem:[#allocation2 + $0x40] sm:$0xff]
      %v257 = vld [vmem:[#allocation2 + $0x48] sm:$0xff]
      %v258 = vld [vmem:[#allocation2 + $0x50] sm:$0xff]
      %v259 = vld [vmem:[#allocation2 + $0x58] sm:$0xff]
      %v260 = vld [vmem:[#allocation2 + $0x60] sm:$0xff]
      %v261 = vld [vmem:[#allocation2 + $0x68] sm:$0xff]
      %v262 = vld [vmem:[#allocation2 + $0x70] sm:$0xff]
      %v263 = vld [vmem:[#allocation2 + $0x78] sm:$0xff]
      %v264 = vld [vmem:[%s212] sm:$0xff]
      %v265 = vld [vmem:[%s212 + $0x8] sm:$0xff]
      %v266 = vld [vmem:[%s212 + $0x10] sm:$0xff]
      %v267 = vld [vmem:[%s212 + $0x18] sm:$0xff]
      %v268 = vld [vmem:[%s212 + $0x20] sm:$0xff]
      %v269 = vld [vmem:[%s212 + $0x28] sm:$0xff]
      %v270 = vld [vmem:[%s212 + $0x30] sm:$0xff]
      %v271 = vld [vmem:[%s212 + $0x38] sm:$0xff]
      %v272 = vld [vmem:[%s212 + $0x40] sm:$0xff]
      %v273 = vld [vmem:[%s212 + $0x48] sm:$0xff]
      %v274 = vld [vmem:[%s212 + $0x50] sm:$0xff]
      %v275 = vld [vmem:[%s212 + $0x58] sm:$0xff]
      %v276 = vld [vmem:[%s212 + $0x60] sm:$0xff]
      %v277 = vld [vmem:[%s212 + $0x68] sm:$0xff]
      %v278 = vld [vmem:[%s212 + $0x70] sm:$0xff]
      %v279 = vld [vmem:[%s212 + $0x78] sm:$0xff]
      %v280 = vld [vmem:[%s219] sm:$0xf]
      %v281 = vld [vmem:[%s219 + $0x4] sm:$0xf]
      %v282 = vld [vmem:[%s219 + $0x8] sm:$0xf]
      %v283 = vld [vmem:[%s219 + $0xc] sm:$0xf]
      %v284 = vld [vmem:[%s219 + $0x10] sm:$0xf]
      %v285 = vld [vmem:[%s219 + $0x14] sm:$0xf]
      %v286 = vld [vmem:[%s219 + $0x18] sm:$0xf]
      %v287 = vld [vmem:[%s219 + $0x1c] sm:$0xf]
      %v288 = vld [vmem:[%s219 + $0x20] sm:$0xf]
      %v289 = vld [vmem:[%s219 + $0x24] sm:$0xf]
      %v290 = vld [vmem:[%s219 + $0x28] sm:$0xf]
      %v291 = vld [vmem:[%s219 + $0x2c] sm:$0xf]
      %v292 = vld [vmem:[%s219 + $0x30] sm:$0xf]
      %v293 = vld [vmem:[%s219 + $0x34] sm:$0xf]
      %v294 = vld [vmem:[%s219 + $0x38] sm:$0xf]
      %v295 = vld [vmem:[%s219 + $0x3c] sm:$0xf]
      %v296 = vld [vmem:[%s219 + $0x40] sm:$0xf]
      %v297 = vld [vmem:[%s219 + $0x44] sm:$0xf]
      %v298 = vld [vmem:[%s219 + $0x48] sm:$0xf]
      %v299 = vld [vmem:[%s219 + $0x4c] sm:$0xf]
      %v300 = vld [vmem:[%s219 + $0x50] sm:$0xf]
      %v301 = vld [vmem:[%s219 + $0x54] sm:$0xf]
      %v302 = vld [vmem:[%s219 + $0x58] sm:$0xf]
      %v303 = vld [vmem:[%s219 + $0x5c] sm:$0xf]
      %v304 = vld [vmem:[%s219 + $0x60] sm:$0xf]
      %v305 = vld [vmem:[%s219 + $0x64] sm:$0xf]
      %v306 = vld [vmem:[%s219 + $0x68] sm:$0xf]
      %v307 = vld [vmem:[%s219 + $0x6c] sm:$0xf]
      %v308 = vld [vmem:[%s219 + $0x70] sm:$0xf]
      %v309 = vld [vmem:[%s219 + $0x74] sm:$0xf]
      %v310 = vld [vmem:[%s219 + $0x78] sm:$0xf]
      %v311 = vld [vmem:[%s219 + $0x7c] sm:$0xf]
      %v328 = vunpack.c.l.b16 %v264
      %v329 = vunpack.c.h.b16 %v264
      %v330 = vunpack.c.l.b16 %v265
      %v331 = vunpack.c.h.b16 %v265
      %v332 = vunpack.c.l.b16 %v266
      %v333 = vunpack.c.h.b16 %v266
      %v334 = vunpack.c.l.b16 %v267
      %v335 = vunpack.c.h.b16 %v267
      %v336 = vunpack.c.l.b16 %v268
      %v337 = vunpack.c.h.b16 %v268
      %v338 = vunpack.c.l.b16 %v269
      %v339 = vunpack.c.h.b16 %v269
      %v340 = vunpack.c.l.b16 %v270
      %v341 = vunpack.c.h.b16 %v270
      %v342 = vunpack.c.l.b16 %v271
      %v343 = vunpack.c.h.b16 %v271
      %v344 = vunpack.c.l.b16 %v272
      %v345 = vunpack.c.h.b16 %v272
      %v346 = vunpack.c.l.b16 %v273
      %v347 = vunpack.c.h.b16 %v273
      %v348 = vunpack.c.l.b16 %v274
      %v349 = vunpack.c.h.b16 %v274
      %v350 = vunpack.c.l.b16 %v275
      %v351 = vunpack.c.h.b16 %v275
      %v352 = vunpack.c.l.b16 %v276
      %v353 = vunpack.c.h.b16 %v276
      %v354 = vunpack.c.l.b16 %v277
      %v355 = vunpack.c.h.b16 %v277
      %v356 = vunpack.c.l.b16 %v278
      %v357 = vunpack.c.h.b16 %v278
      %v358 = vunpack.c.l.b16 %v279
      %v359 = vunpack.c.h.b16 %v279
      %v360 = vpack.c.b16 %v330, %v328
      %v361 = vpack.c.b16 %v331, %v329
      %v362 = vpack.c.b16 %v334, %v332
      %v363 = vpack.c.b16 %v335, %v333
      %v364 = vpack.c.b16 %v338, %v336
      %v365 = vpack.c.b16 %v339, %v337
      %v366 = vpack.c.b16 %v342, %v340
      %v367 = vpack.c.b16 %v343, %v341
      %v368 = vpack.c.b16 %v346, %v344
      %v369 = vpack.c.b16 %v347, %v345
      %v370 = vpack.c.b16 %v350, %v348
      %v371 = vpack.c.b16 %v351, %v349
      %v372 = vpack.c.b16 %v354, %v352
      %v373 = vpack.c.b16 %v355, %v353
      %v374 = vpack.c.b16 %v358, %v356
      %v375 = vpack.c.b16 %v359, %v357
      %v424 = vunpack.c.l.b16 %v280
      %v425 = vunpack.c.l.b16 %v281
      %v426 = vunpack.c.l.b16 %v282
      %v427 = vunpack.c.l.b16 %v283
      %v428 = vunpack.c.l.b16 %v284
      %v429 = vunpack.c.l.b16 %v285
      %v430 = vunpack.c.l.b16 %v286
      %v431 = vunpack.c.l.b16 %v287
      %v432 = vunpack.c.l.b16 %v288
      %v433 = vunpack.c.l.b16 %v289
      %v434 = vunpack.c.l.b16 %v290
      %v435 = vunpack.c.l.b16 %v291
      %v436 = vunpack.c.l.b16 %v292
      %v437 = vunpack.c.l.b16 %v293
      %v438 = vunpack.c.l.b16 %v294
      %v439 = vunpack.c.l.b16 %v295
      %v440 = vunpack.c.l.b16 %v296
      %v441 = vunpack.c.l.b16 %v297
      %v442 = vunpack.c.l.b16 %v298
      %v443 = vunpack.c.l.b16 %v299
      %v444 = vunpack.c.l.b16 %v300
      %v445 = vunpack.c.l.b16 %v301
      %v446 = vunpack.c.l.b16 %v302
      %v447 = vunpack.c.l.b16 %v303
      %v448 = vunpack.c.l.b16 %v304
      %v449 = vunpack.c.l.b16 %v305
      %v450 = vunpack.c.l.b16 %v306
      %v451 = vunpack.c.l.b16 %v307
      %v452 = vunpack.c.l.b16 %v308
      %v453 = vunpack.c.l.b16 %v309
      %v454 = vunpack.c.l.b16 %v310
      %v455 = vunpack.c.l.b16 %v311
      %v456 = vpack.c.b16 %v425, %v424
      %v457 = vpack.c.b16 %v427, %v426
      %v458 = vpack.c.b16 %v429, %v428
      %v459 = vpack.c.b16 %v431, %v430
      %v460 = vpack.c.b16 %v433, %v432
      %v461 = vpack.c.b16 %v435, %v434
      %v462 = vpack.c.b16 %v437, %v436
      %v463 = vpack.c.b16 %v439, %v438
      %v464 = vpack.c.b16 %v441, %v440
      %v465 = vpack.c.b16 %v443, %v442
      %v466 = vpack.c.b16 %v445, %v444
      %v467 = vpack.c.b16 %v447, %v446
      %v468 = vpack.c.b16 %v449, %v448
      %v469 = vpack.c.b16 %v451, %v450
      %v470 = vpack.c.b16 %v453, %v452
      %v471 = vpack.c.b16 %v455, %v454
      %488 = vmatprep.subr.bf16.mxu0 0
      %489 = vmatpush1.bf16.msra.mxu0 %v456
      %490 = vmatprep.subr.bf16.mxu0 0
      %491 = vmatpush1.bf16.msra.mxu0 %v457
      %492 = vmatprep.subr.bf16.mxu0 0
      %493 = vmatpush1.bf16.msra.mxu0 %v458
      %494 = vmatprep.subr.bf16.mxu0 0
      %495 = vmatpush1.bf16.msra.mxu0 %v459
      %496 = vmatprep.subr.bf16.mxu0 0
      %497 = vmatpush1.bf16.msra.mxu0 %v460
      %498 = vmatprep.subr.bf16.mxu0 0
      %499 = vmatpush1.bf16.msra.mxu0 %v461
      %500 = vmatprep.subr.bf16.mxu0 0
      %501 = vmatpush1.bf16.msra.mxu0 %v462
      %502 = vmatprep.subr.bf16.mxu0 0
      %503 = vmatpush1.bf16.msra.mxu0 %v463
      %504 = vmatprep.subr.bf16.mxu0 0
      %505 = vmatpush1.bf16.msra.mxu0 %v464
      %506 = vmatprep.subr.bf16.mxu0 0
      %507 = vmatpush1.bf16.msra.mxu0 %v465
      %508 = vmatprep.subr.bf16.mxu0 0
      %509 = vmatpush1.bf16.msra.mxu0 %v466
      %510 = vmatprep.subr.bf16.mxu0 0
      %511 = vmatpush1.bf16.msra.mxu0 %v467
      %512 = vmatprep.subr.bf16.mxu0 0
      %513 = vmatpush1.bf16.msra.mxu0 %v468
      %514 = vmatprep.subr.bf16.mxu0 0
      %515 = vmatpush1.bf16.msra.mxu0 %v469
      %516 = vmatprep.subr.bf16.mxu0 0
      %517 = vmatpush1.bf16.msra.mxu0 %v470
      %518 = vmatprep.subr.bf16.mxu0 0
      %519 = vmatpush1.bf16.msra.mxu0 %v471
      %520 = vmatprep.mubr.bf16.mxu0 %v361
      %521 = vmatmul.mubr.bf16.gmra.mrb[0].mxu0 %v360
      %v522 = vpop.f32.mrb[0].mxu0
      %v523 = vadd.f32 0.0, %v522
      %v524 = vpop.f32.mrb[0].mxu0
      %v525 = vpop.f32.mrb[0].mxu0
      %v526 = vadd.f32 0.0, %v525
      %v527 = vpop.f32.mrb[0].mxu0
      %528 = vmatprep.mubr.bf16.mxu0 %v363
      %529 = vmatmul.mubr.bf16.gmra.mrb[0].mxu0 %v362
      %v530 = vpop.f32.mrb[0].mxu0
      %v531 = vadd.f32 0.0, %v530
      %v532 = vpop.f32.mrb[0].mxu0
      %v533 = vpop.f32.mrb[0].mxu0
      %v534 = vadd.f32 0.0, %v533
      %v535 = vpop.f32.mrb[0].mxu0
      %536 = vmatprep.mubr.bf16.mxu0 %v365
      %537 = vmatmul.mubr.bf16.gmra.mrb[0].mxu0 %v364
      %v538 = vpop.f32.mrb[0].mxu0
      %v539 = vadd.f32 0.0, %v538
      %v540 = vpop.f32.mrb[0].mxu0
      %v541 = vpop.f32.mrb[0].mxu0
      %v542 = vadd.f32 0.0, %v541
      %v543 = vpop.f32.mrb[0].mxu0
      %544 = vmatprep.mubr.bf16.mxu0 %v367
      %545 = vmatmul.mubr.bf16.gmra.mrb[0].mxu0 %v366
      %v546 = vpop.f32.mrb[0].mxu0
      %v547 = vadd.f32 0.0, %v546
      %v548 = vpop.f32.mrb[0].mxu0
      %v549 = vpop.f32.mrb[0].mxu0
      %v550 = vadd.f32 0.0, %v549
      %v551 = vpop.f32.mrb[0].mxu0
      %552 = vmatprep.mubr.bf16.mxu0 %v369
      %553 = vmatmul.mubr.bf16.gmra.mrb[0].mxu0 %v368
      %v554 = vpop.f32.mrb[0].mxu0
      %v555 = vadd.f32 0.0, %v554
      %v556 = vpop.f32.mrb[0].mxu0
      %v557 = vpop.f32.mrb[0].mxu0
      %v558 = vadd.f32 0.0, %v557
      %v559 = vpop.f32.mrb[0].mxu0
      %560 = vmatprep.mubr.bf16.mxu0 %v371
      %561 = vmatmul.mubr.bf16.gmra.mrb[0].mxu0 %v370
      %v562 = vpop.f32.mrb[0].mxu0
      %v563 = vadd.f32 0.0, %v562
      %v564 = vpop.f32.mrb[0].mxu0
      %v565 = vpop.f32.mrb[0].mxu0
      %v566 = vadd.f32 0.0, %v565
      %v567 = vpop.f32.mrb[0].mxu0
      %568 = vmatprep.mubr.bf16.mxu0 %v373
      %569 = vmatmul.mubr.bf16.gmra.mrb[0].mxu0 %v372
      %v570 = vpop.f32.mrb[0].mxu0
      %v571 = vadd.f32 0.0, %v570
      %v572 = vpop.f32.mrb[0].mxu0
      %v573 = vpop.f32.mrb[0].mxu0
      %v574 = vadd.f32 0.0, %v573
      %v575 = vpop.f32.mrb[0].mxu0
      %576 = vmatprep.mubr.bf16.mxu0 %v375
      %577 = vmatmul.mubr.bf16.gmra.mrb[0].mxu0 %v374
      %v578 = vpop.f32.mrb[0].mxu0
      %v579 = vadd.f32 0.0, %v578
      %v580 = vpop.f32.mrb[0].mxu0
      %v581 = vpop.f32.mrb[0].mxu0
      %v582 = vadd.f32 0.0, %v581
      %v583 = vpop.f32.mrb[0].mxu0
      %584 = vdwg.mxu0
      %v585 = vadd.f32 %v248, %v523
      %v586 = vadd.f32 %v249, %v526
      %v587 = vadd.f32 %v250, %v531
      %v588 = vadd.f32 %v251, %v534
      %v589 = vadd.f32 %v252, %v539
      %v590 = vadd.f32 %v253, %v542
      %v591 = vadd.f32 %v254, %v547
      %v592 = vadd.f32 %v255, %v550
      %v593 = vadd.f32 %v256, %v555
      %v594 = vadd.f32 %v257, %v558
      %v595 = vadd.f32 %v258, %v563
      %v596 = vadd.f32 %v259, %v566
      %v597 = vadd.f32 %v260, %v571
      %v598 = vadd.f32 %v261, %v574
      %v599 = vadd.f32 %v262, %v579
      %v600 = vadd.f32 %v263, %v582
      %601 = vst [vmem:[#allocation2] sm:$0xff] %v585
      %602 = vst [vmem:[#allocation2 + $0x8] sm:$0xff] %v586
      %603 = vst [vmem:[#allocation2 + $0x10] sm:$0xff] %v587
      %604 = vst [vmem:[#allocation2 + $0x18] sm:$0xff] %v588
      %605 = vst [vmem:[#allocation2 + $0x20] sm:$0xff] %v589
      %606 = vst [vmem:[#allocation2 + $0x28] sm:$0xff] %v590
      %607 = vst [vmem:[#allocation2 + $0x30] sm:$0xff] %v591
      %608 = vst [vmem:[#allocation2 + $0x38] sm:$0xff] %v592
      %609 = vst [vmem:[#allocation2 + $0x40] sm:$0xff] %v593
      %610 = vst [vmem:[#allocation2 + $0x48] sm:$0xff] %v594
      %611 = vst [vmem:[#allocation2 + $0x50] sm:$0xff] %v595
      %612 = vst [vmem:[#allocation2 + $0x58] sm:$0xff] %v596
      %613 = vst [vmem:[#allocation2 + $0x60] sm:$0xff] %v597
      %614 = vst [vmem:[#allocation2 + $0x68] sm:$0xff] %v598
      %615 = vst [vmem:[#allocation2 + $0x70] sm:$0xff] %v599
      %616 = vst [vmem:[#allocation2 + $0x78] sm:$0xff] %v600
      // Predicated region
      $region37: #{a_call__.7} parent=31 // pred_check
        %p617 = pneg %p228
      $region38: #{a_call__.7} parent=31 // pred_check_branch
        %619 = sbr.rel (%p617) target = $region40
      $region39: #{a_call__.7} parent=31 // pred_region
        %v620 = vld [vmem:[#allocation2] sm:$0xff]
        %v621 = vld [vmem:[#allocation2 + $0x8] sm:$0xff]
        %v622 = vld [vmem:[#allocation2 + $0x10] sm:$0xff]
        %v623 = vld [vmem:[#allocation2 + $0x18] sm:$0xff]
        %v624 = vld [vmem:[#allocation2 + $0x20] sm:$0xff]
        %v625 = vld [vmem:[#allocation2 + $0x28] sm:$0xff]
        %v626 = vld [vmem:[#allocation2 + $0x30] sm:$0xff]
        %v627 = vld [vmem:[#allocation2 + $0x38] sm:$0xff]
        %v628 = vld [vmem:[#allocation2 + $0x40] sm:$0xff]
        %v629 = vld [vmem:[#allocation2 + $0x48] sm:$0xff]
        %v630 = vld [vmem:[#allocation2 + $0x50] sm:$0xff]
        %v631 = vld [vmem:[#allocation2 + $0x58] sm:$0xff]
        %v632 = vld [vmem:[#allocation2 + $0x60] sm:$0xff]
        %v633 = vld [vmem:[#allocation2 + $0x68] sm:$0xff]
        %v634 = vld [vmem:[#allocation2 + $0x70] sm:$0xff]
        %v635 = vld [vmem:[#allocation2 + $0x78] sm:$0xff]
        %v636 = vld [vmem:[%s2] sm:$0x1]
        %v638 = vlaneseq
        %v639 = vshrl.u32 %v638, 7
        %v640 = vsub.s32 0, %v639
        %v641 = vrot.slane %v636, %v640
        %v643 = vadd.f32 %v620, %v641
        %v644 = vadd.f32 %v621, %v641
        %v645 = vadd.f32 %v622, %v641
        %v646 = vadd.f32 %v623, %v641
        %v647 = vadd.f32 %v624, %v641
        %v648 = vadd.f32 %v625, %v641
        %v649 = vadd.f32 %v626, %v641
        %v650 = vadd.f32 %v627, %v641
        %v651 = vadd.f32 %v628, %v641
        %v652 = vadd.f32 %v629, %v641
        %v653 = vadd.f32 %v630, %v641
        %v654 = vadd.f32 %v631, %v641
        %v655 = vadd.f32 %v632, %v641
        %v656 = vadd.f32 %v633, %v641
        %v657 = vadd.f32 %v634, %v641
        %v658 = vadd.f32 %v635, %v641
        %v659 = vlaneseq
        %v660 = vand.u32 %v659, 127
        %vm661 = vcmp.lt.s32.totalorder %v660, 8
        %v662 = vsel %vm661, %v643, -inf
        %v663 = vsel %vm661, %v644, -inf
        %v664 = vsel %vm661, %v645, -inf
        %v665 = vsel %vm661, %v646, -inf
        %v666 = vsel %vm661, %v647, -inf
        %v667 = vsel %vm661, %v648, -inf
        %v668 = vsel %vm661, %v649, -inf
        %v669 = vsel %vm661, %v650, -inf
        %v670 = vsel %vm661, %v651, -inf
        %v671 = vsel %vm661, %v652, -inf
        %v672 = vsel %vm661, %v653, -inf
        %v673 = vsel %vm661, %v654, -inf
        %v674 = vsel %vm661, %v655, -inf
        %v675 = vsel %vm661, %v656, -inf
        %v676 = vsel %vm661, %v657, -inf
        %v677 = vsel %vm661, %v658, -inf
        %678 = vmax.xlane.f32.xlu0 %v662
        %v679 = vpop.xlane.xlu0 %678
        %680 = vmax.xlane.f32.xlu0 %v663
        %v681 = vpop.xlane.xlu0 %680
        %682 = vmax.xlane.f32.xlu0 %v664
        %v683 = vpop.xlane.xlu0 %682
        %684 = vmax.xlane.f32.xlu0 %v665
        %v685 = vpop.xlane.xlu0 %684
        %686 = vmax.xlane.f32.xlu0 %v666
        %v687 = vpop.xlane.xlu0 %686
        %688 = vmax.xlane.f32.xlu0 %v667
        %v689 = vpop.xlane.xlu0 %688
        %690 = vmax.xlane.f32.xlu0 %v668
        %v691 = vpop.xlane.xlu0 %690
        %692 = vmax.xlane.f32.xlu0 %v669
        %v693 = vpop.xlane.xlu0 %692
        %694 = vmax.xlane.f32.xlu0 %v670
        %v695 = vpop.xlane.xlu0 %694
        %696 = vmax.xlane.f32.xlu0 %v671
        %v697 = vpop.xlane.xlu0 %696
        %698 = vmax.xlane.f32.xlu0 %v672
        %v699 = vpop.xlane.xlu0 %698
        %700 = vmax.xlane.f32.xlu0 %v673
        %v701 = vpop.xlane.xlu0 %700
        %702 = vmax.xlane.f32.xlu0 %v674
        %v703 = vpop.xlane.xlu0 %702
        %704 = vmax.xlane.f32.xlu0 %v675
        %v705 = vpop.xlane.xlu0 %704
        %706 = vmax.xlane.f32.xlu0 %v676
        %v707 = vpop.xlane.xlu0 %706
        %708 = vmax.xlane.f32.xlu0 %v677
        %v709 = vpop.xlane.xlu0 %708
        %v710 = vsub.f32 %v662, %v679
        %v711 = vsub.f32 %v663, %v681
        %v712 = vsub.f32 %v664, %v683
        %v713 = vsub.f32 %v665, %v685
        %v714 = vsub.f32 %v666, %v687
        %v715 = vsub.f32 %v667, %v689
        %v716 = vsub.f32 %v668, %v691
        %v717 = vsub.f32 %v669, %v693
        %v718 = vsub.f32 %v670, %v695
        %v719 = vsub.f32 %v671, %v697
        %v720 = vsub.f32 %v672, %v699
        %v721 = vsub.f32 %v673, %v701
        %v722 = vsub.f32 %v674, %v703
        %v723 = vsub.f32 %v675, %v705
        %v724 = vsub.f32 %v676, %v707
        %v725 = vsub.f32 %v677, %v709
        %v726 = vmul.f32 %v710, 1.442695
        %v727 = vpow.pop %v726
        %v728 = vmul.f32 %v711, 1.442695
        %v729 = vpow.pop %v728
        %v730 = vmul.f32 %v712, 1.442695
        %v731 = vpow.pop %v730
        %v732 = vmul.f32 %v713, 1.442695
        %v733 = vpow.pop %v732
        %v734 = vmul.f32 %v714, 1.442695
        %v735 = vpow.pop %v734
        %v736 = vmul.f32 %v715, 1.442695
        %v737 = vpow.pop %v736
        %v738 = vmul.f32 %v716, 1.442695
        %v739 = vpow.pop %v738
        %v740 = vmul.f32 %v717, 1.442695
        %v741 = vpow.pop %v740
        %v742 = vmul.f32 %v718, 1.442695
        %v743 = vpow.pop %v742
        %v744 = vmul.f32 %v719, 1.442695
        %v745 = vpow.pop %v744
        %v746 = vmul.f32 %v720, 1.442695
        %v747 = vpow.pop %v746
        %v748 = vmul.f32 %v721, 1.442695
        %v749 = vpow.pop %v748
        %v750 = vmul.f32 %v722, 1.442695
        %v751 = vpow.pop %v750
        %v752 = vmul.f32 %v723, 1.442695
        %v753 = vpow.pop %v752
        %v754 = vmul.f32 %v724, 1.442695
        %v755 = vpow.pop %v754
        %v756 = vmul.f32 %v725, 1.442695
        %v757 = vpow.pop %v756
        %758 = vadd.xlane.f32.xlu0 %v727
        %v759 = vpop.xlane.xlu0 %758
        %760 = vadd.xlane.f32.xlu0 %v729
        %v761 = vpop.xlane.xlu0 %760
        %762 = vadd.xlane.f32.xlu0 %v731
        %v763 = vpop.xlane.xlu0 %762
        %764 = vadd.xlane.f32.xlu0 %v733
        %v765 = vpop.xlane.xlu0 %764
        %766 = vadd.xlane.f32.xlu0 %v735
        %v767 = vpop.xlane.xlu0 %766
        %768 = vadd.xlane.f32.xlu0 %v737
        %v769 = vpop.xlane.xlu0 %768
        %770 = vadd.xlane.f32.xlu0 %v739
        %v771 = vpop.xlane.xlu0 %770
        %772 = vadd.xlane.f32.xlu0 %v741
        %v773 = vpop.xlane.xlu0 %772
        %774 = vadd.xlane.f32.xlu0 %v743
        %v775 = vpop.xlane.xlu0 %774
        %776 = vadd.xlane.f32.xlu0 %v745
        %v777 = vpop.xlane.xlu0 %776
        %778 = vadd.xlane.f32.xlu0 %v747
        %v779 = vpop.xlane.xlu0 %778
        %780 = vadd.xlane.f32.xlu0 %v749
        %v781 = vpop.xlane.xlu0 %780
        %782 = vadd.xlane.f32.xlu0 %v751
        %v783 = vpop.xlane.xlu0 %782
        %784 = vadd.xlane.f32.xlu0 %v753
        %v785 = vpop.xlane.xlu0 %784
        %786 = vadd.xlane.f32.xlu0 %v755
        %v787 = vpop.xlane.xlu0 %786
        %788 = vadd.xlane.f32.xlu0 %v757
        %v789 = vpop.xlane.xlu0 %788
        %v790 = vlog2.pop %v759
        %v791 = vmul.f32 %v790, 0.6931472
        %v792 = vlog2.pop %v761
        %v793 = vmul.f32 %v792, 0.6931472
        %v794 = vlog2.pop %v763
        %v795 = vmul.f32 %v794, 0.6931472
        %v796 = vlog2.pop %v765
        %v797 = vmul.f32 %v796, 0.6931472
        %v798 = vlog2.pop %v767
        %v799 = vmul.f32 %v798, 0.6931472
        %v800 = vlog2.pop %v769
        %v801 = vmul.f32 %v800, 0.6931472
        %v802 = vlog2.pop %v771
        %v803 = vmul.f32 %v802, 0.6931472
        %v804 = vlog2.pop %v773
        %v805 = vmul.f32 %v804, 0.6931472
        %v806 = vlog2.pop %v775
        %v807 = vmul.f32 %v806, 0.6931472
        %v808 = vlog2.pop %v777
        %v809 = vmul.f32 %v808, 0.6931472
        %v810 = vlog2.pop %v779
        %v811 = vmul.f32 %v810, 0.6931472
        %v812 = vlog2.pop %v781
        %v813 = vmul.f32 %v812, 0.6931472
        %v814 = vlog2.pop %v783
        %v815 = vmul.f32 %v814, 0.6931472
        %v816 = vlog2.pop %v785
        %v817 = vmul.f32 %v816, 0.6931472
        %v818 = vlog2.pop %v787
        %v819 = vmul.f32 %v818, 0.6931472
        %v820 = vlog2.pop %v789
        %v821 = vmul.f32 %v820, 0.6931472
        %v822 = vsub.f32 %v710, %v791
        %v823 = vsub.f32 %v711, %v793
        %v824 = vsub.f32 %v712, %v795
        %v825 = vsub.f32 %v713, %v797
        %v826 = vsub.f32 %v714, %v799
        %v827 = vsub.f32 %v715, %v801
        %v828 = vsub.f32 %v716, %v803
        %v829 = vsub.f32 %v717, %v805
        %v830 = vsub.f32 %v718, %v807
        %v831 = vsub.f32 %v719, %v809
        %v832 = vsub.f32 %v720, %v811
        %v833 = vsub.f32 %v721, %v813
        %v834 = vsub.f32 %v722, %v815
        %v835 = vsub.f32 %v723, %v817
        %v836 = vsub.f32 %v724, %v819
        %v837 = vsub.f32 %v725, %v821
        %v838 = vsel %vm661, %v822, 0.0
        %v839 = vsel %vm661, %v823, 0.0
        %v840 = vsel %vm661, %v824, 0.0
        %v841 = vsel %vm661, %v825, 0.0
        %v842 = vsel %vm661, %v826, 0.0
        %v843 = vsel %vm661, %v827, 0.0
        %v844 = vsel %vm661, %v828, 0.0
        %v845 = vsel %vm661, %v829, 0.0
        %v846 = vsel %vm661, %v830, 0.0
        %v847 = vsel %vm661, %v831, 0.0
        %v848 = vsel %vm661, %v832, 0.0
        %v849 = vsel %vm661, %v833, 0.0
        %v850 = vsel %vm661, %v834, 0.0
        %v851 = vsel %vm661, %v835, 0.0
        %v852 = vsel %vm661, %v836, 0.0
        %v853 = vsel %vm661, %v837, 0.0
        %854 = vst [vmem:[%s225] sm:$0xff] %v838
        %855 = vst [vmem:[%s225 + $0x8] sm:$0xff] %v839
        %856 = vst [vmem:[%s225 + $0x10] sm:$0xff] %v840
        %857 = vst [vmem:[%s225 + $0x18] sm:$0xff] %v841
        %858 = vst [vmem:[%s225 + $0x20] sm:$0xff] %v842
        %859 = vst [vmem:[%s225 + $0x28] sm:$0xff] %v843
        %860 = vst [vmem:[%s225 + $0x30] sm:$0xff] %v844
        %861 = vst [vmem:[%s225 + $0x38] sm:$0xff] %v845
        %862 = vst [vmem:[%s225 + $0x40] sm:$0xff] %v846
        %863 = vst [vmem:[%s225 + $0x48] sm:$0xff] %v847
        %864 = vst [vmem:[%s225 + $0x50] sm:$0xff] %v848
        %865 = vst [vmem:[%s225 + $0x58] sm:$0xff] %v849
        %866 = vst [vmem:[%s225 + $0x60] sm:$0xff] %v850
        %867 = vst [vmem:[%s225 + $0x68] sm:$0xff] %v851
        %868 = vst [vmem:[%s225 + $0x70] sm:$0xff] %v852
        %869 = vst [vmem:[%s225 + $0x78] sm:$0xff] %v853
      $region40: #{a_call__.7} parent=31 // pred_fallthru
        _
      %s870 = smul.u32 16, %s18
      %p871 = scmp.lt.s32.totalorder %s870, 31
      %s872 = scalar_select %p871, %s870, 31
      %s873 = smul.addr %s872, 8
      %s874 = scalar_lea.vmem %s3, %s873
      // Predicated region
      $region41: #{a_call__.7} parent=31 // pred_check
        %p875 = pneg %p119
      $region42: #{a_call__.7} parent=31 // pred_check_branch
        %877 = sbr.rel (%p875) target = $region44
      $region43: #{a_call__.7} parent=31 // pred_region
        %s878 = smul.u32 16, %s18
      $region44: #{a_call__.7} parent=31 // pred_fallthru
        _
    $region32: #{a_call__.7} parent=5 // pred_fallthru
      _
    %p879 = scmp.le.s32.totalorder 2, %s9
    // Predicated region
    $region45: #{a_call__.7} parent=5 // pred_check
      %p880 = pneg %p879
    $region46: #{a_call__.7} parent=5 // pred_check_branch
      %882 = sbr.rel (%p880) target = $region48
    $region47: #{a_call__.7} parent=5 // pred_region
      %s883 = ssub.s32 %s9, 2
      // Predicated region
      $region49: #{a_call__.7} parent=47 // pred_check
        %p884 = pneg %p125
      $region50: #{a_call__.7} parent=47 // pred_check_branch
        %886 = sbr.rel (%p884) target = $region52
      $region51: #{a_call__.7} parent=47 // pred_region
        %s887 = smul.u32 16, %s20
        %p888 = scmp.lt.s32.totalorder %s887, 31
        %s889 = scalar_select %p888, %s887, 31
        %s890 = smul.addr %s889, 8
        %s891 = scalar_lea.vmem %s3, %s890
      $region52: #{a_call__.7} parent=47 // pred_fallthru
        _
    $region48: #{a_call__.7} parent=5 // pred_fallthru
      _
  $region6: #{a_call__.7} parent=0 // loop_footer
    %s13 = sadd.s32 1, %s9
  $region7: #{a_call__.7} parent=0 // loop_footer_branch
    %8 = sbr.rel target = $region3
  $region8: #{a_call__.7} parent=0 // loop_exit
    _

</llo_original>
